<compile_context>
chip_gen: v7x
topology: tpu7x:2x2x1
jax: 0.10.0
libtpu: 0.0.40
codegen_flags: <defaults>
</compile_context>

<pallas_src>
import functools

import jax
import jax.numpy as jnp
from jax.experimental import pallas as pl
from jax.experimental.pallas import tpu as pltpu

# --- model constants (from train/model.py) ---
GROUPS_PER_CONTEXT = 3
GROUP_EMBEDDING_INTER_SIZE = 16
GROUP_EMBEDDING_SIZE = 6
HEAD_INTER_SIZE = 16
LETTERS_PER_GROUP = 4
LETTERS_PER_CONTEXT = LETTERS_PER_GROUP * GROUPS_PER_CONTEXT
LETTER_EMBEDDING_INTER_SIZE = 64
LETTER_EMBEDDING_SIZE = 3
ALPHABET_LENGTH = 26  # lang.ALPHABET_LENGTH

LEAKY_SLOPE = 0.01  # nn.LeakyReLU() default

IN_FEATURES = LETTERS_PER_CONTEXT * ALPHABET_LENGTH                 # 312
H1_FEATURES = LETTERS_PER_CONTEXT * LETTER_EMBEDDING_INTER_SIZE     # 768
PAD_LANES = 128                                                     # lane-dense width

DEFAULT_TB = 2048      # max rows per grid step; ~20 MiB VMEM footprint (v7x-safe)
ROW_ALIGN = 16         # bf16 sublane tile (16, 128) -> keep row tiles 16-aligned


# -------------------------- Pallas kernel --------------------------

def _kernel(x_ref, w1_ref, b1_ref, w2_ref, ws_ref, bs_ref, o_ref):
    # x_ref: (TB, 312) input tile (any float dtype; cast to bf16 for the MXU)
    # w1_ref: (312, 768) bf16     b1_ref: (1, 768) f32
    # w2_ref: (768, 128) bf16
    # ws_ref: (4, 128, 128) bf16  (groupInter, groupOut, headInter, headOut)
    # bs_ref: (5, 128) f32        (b2..b6, lane-padded)
    # o_ref : (TB, 128) bf16      (lane-padded logits)
    x = x_ref[...].astype(jnp.bfloat16)                              # (TB, 312)
    bs = bs_ref[...]                                                 # (5, 128) f32

    # letter_embedding: Linear -> LeakyReLU -> (Dropout) -> Linear -> ReLU -> (Dropout)
    h = jnp.dot(x, w1_ref[...], preferred_element_type=jnp.float32) + b1_ref[...]
    h = jnp.maximum(h, LEAKY_SLOPE * h)                              # (TB, 768)
    h = jnp.dot(h.astype(jnp.bfloat16), w2_ref[...],
                preferred_element_type=jnp.float32) + bs[0:1]
    h = jnp.maximum(h, 0.0)                                          # (TB, 128) padded

    # group_embedding: Linear -> ReLU -> (Dropout) -> Linear -> ReLU -> (Dropout)
    h = jnp.dot(h.astype(jnp.bfloat16), ws_ref[0],
                preferred_element_type=jnp.float32) + bs[1:2]
    h = jnp.maximum(h, 0.0)
    h = jnp.dot(h.astype(jnp.bfloat16), ws_ref[1],
                preferred_element_type=jnp.float32) + bs[2:3]
    h = jnp.maximum(h, 0.0)

    # head: Linear -> ReLU -> (Dropout) -> Linear
    h = jnp.dot(h.astype(jnp.bfloat16), ws_ref[2],
                preferred_element_type=jnp.float32) + bs[3:4]
    h = jnp.maximum(h, 0.0)
    h = jnp.dot(h.astype(jnp.bfloat16), ws_ref[3],
                preferred_element_type=jnp.float32) + bs[4:5]
    o_ref[...] = h.astype(o_ref.dtype)                               # bf16 store


# -------------------------- weight assembly (one-time) --------------------------

def _block_diag(w, n):
    """w: (din, dout) -> block-diagonal (n*din, n*dout)."""
    din, dout = w.shape
    bd = jnp.zeros((n * din, n * dout), dtype=w.dtype)
    for i in range(n):
        bd = bd.at[i * din:(i + 1) * din, i * dout:(i + 1) * dout].set(w)
    return bd


def _pad2d(a, rows, cols):
    return jnp.pad(a, ((0, rows - a.shape[0]), (0, cols - a.shape[1])))


def _pad1d(a, cols):
    return jnp.pad(a, (0, cols - a.shape[0]))


def prepare_dense_params(params):
    """One-time assembly of block-diagonal, lane-padded dense weights/biases.

    Zero padding stays exact in bf16 (0.0 is exactly representable): padded bias
    lanes are 0, ReLU(0)=0, and padded weight rows are 0, so padded lanes never
    contribute to the valid lanes.
    """
    w1 = _block_diag(params["letter1_w"], LETTERS_PER_CONTEXT)              # (312, 768)
    b1 = jnp.tile(params["letter1_b"], LETTERS_PER_CONTEXT)[None, :]        # (1, 768)

    w2 = _pad2d(_block_diag(params["letter2_w"], LETTERS_PER_CONTEXT),
                H1_FEATURES, PAD_LANES)                                      # (768, 128)
    w3 = _pad2d(_block_diag(params["group_inter_w"], GROUPS_PER_CONTEXT),
                PAD_LANES, PAD_LANES)                                        # (128, 128)
    w4 = _pad2d(_block_diag(params["group_out_w"], GROUPS_PER_CONTEXT),
                PAD_LANES, PAD_LANES)                                        # (128, 128)
    w5 = _pad2d(params["head_inter_w"], PAD_LANES, PAD_LANES)                # (128, 128)
    w6 = _pad2d(params["head_out_w"], PAD_LANES, PAD_LANES)                  # (128, 128)

    b2 = _pad1d(jnp.tile(params["letter2_b"], LETTERS_PER_CONTEXT), PAD_LANES)
    b3 = _pad1d(jnp.tile(params["group_inter_b"], GROUPS_PER_CONTEXT), PAD_LANES)
    b4 = _pad1d(jnp.tile(params["group_out_b"], GROUPS_PER_CONTEXT), PAD_LANES)
    b5 = _pad1d(params["head_inter_b"], PAD_LANES)
    b6 = _pad1d(params["head_out_b"], PAD_LANES)

    w1 = w1.astype(jnp.bfloat16)
    b1 = b1.astype(jnp.float32)
    w2 = w2.astype(jnp.bfloat16)
    ws = jnp.stack([w3, w4, w5, w6]).astype(jnp.bfloat16)                    # (4, 128, 128)
    bs = jnp.stack([b2, b3, b4, b5, b6]).astype(jnp.float32)                 # (5, 128)
    return (w1, b1, w2, ws, bs)


def make_params(key):
    """Deterministic kaiming-uniform-ish weights, zero biases (init_weights())."""
    def kaiming(k, din, dout):
        bound = jnp.sqrt(6.0 / din)
        return jax.random.uniform(k, (din, dout), jnp.float32, -bound, bound)

    ks = jax.random.split(key, 6)
    return {
        "letter1_w": kaiming(ks[0], ALPHABET_LENGTH, LETTER_EMBEDDING_INTER_SIZE),
        "letter1_b": jnp.zeros((LETTER_EMBEDDING_INTER_SIZE,), jnp.float32),
        "letter2_w": kaiming(ks[1], LETTER_EMBEDDING_INTER_SIZE, LETTER_EMBEDDING_SIZE),
        "letter2_b": jnp.zeros((LETTER_EMBEDDING_SIZE,), jnp.float32),
        "group_inter_w": kaiming(ks[2], LETTERS_PER_GROUP * LETTER_EMBEDDING_SIZE,
                                 GROUP_EMBEDDING_INTER_SIZE),
        "group_inter_b": jnp.zeros((GROUP_EMBEDDING_INTER_SIZE,), jnp.float32),
        "group_out_w": kaiming(ks[3], GROUP_EMBEDDING_INTER_SIZE, GROUP_EMBEDDING_SIZE),
        "group_out_b": jnp.zeros((GROUP_EMBEDDING_SIZE,), jnp.float32),
        "head_inter_w": kaiming(ks[4], GROUPS_PER_CONTEXT * GROUP_EMBEDDING_SIZE,
                                HEAD_INTER_SIZE),
        "head_inter_b": jnp.zeros((HEAD_INTER_SIZE,), jnp.float32),
        "head_out_w": kaiming(ks[5], HEAD_INTER_SIZE, ALPHABET_LENGTH),
        "head_out_b": jnp.zeros((ALPHABET_LENGTH,), jnp.float32),
    }


# -------------------------- forward --------------------------

@functools.partial(jax.jit, static_argnames=("tb",))
def _forward_padded(x_padded, dense_params, tb):
    """x_padded: (Bp, 312), Bp % tb == 0 -> (Bp, 128) bf16 padded logits."""
    w1, b1, w2, ws, bs = dense_params
    Bp = x_padded.shape[0]
    grid = (Bp // tb,)

    in_specs = [
        pl.BlockSpec((tb, IN_FEATURES), lambda i: (i, 0)),   # batch tile moves with grid
        pl.BlockSpec(w1.shape, lambda i: (0, 0)),            # VMEM-resident weights
        pl.BlockSpec(b1.shape, lambda i: (0, 0)),
        pl.BlockSpec(w2.shape, lambda i: (0, 0)),
        pl.BlockSpec(ws.shape, lambda i: (0, 0, 0)),
        pl.BlockSpec(bs.shape, lambda i: (0, 0)),
    ]

    return pl.pallas_call(
        _kernel,
        out_shape=jax.ShapeDtypeStruct((Bp, PAD_LANES), jnp.bfloat16),
        grid=grid,
        in_specs=in_specs,
        out_specs=pl.BlockSpec((tb, PAD_LANES), lambda i: (i, 0)),
        compiler_params=pltpu.CompilerParams(
            dimension_semantics=("parallel",),   # shard batch tiles across TCs (v7x)
            vmem_limit_bytes=48 << 20,           # headroom under v7x's 64 MiB physical
        ),
    )(x_padded, w1, b1, w2, ws, bs)


def _round_up(v, m):
    return ((v + m - 1) // m) * m


def _cdiv(a, b):
    return -(-a // b)


def _pick_tb(B, tb):
    """Pick a batch tile: >= 2 grid steps when possible (v7x dual-TC), 16-aligned,
    capped at DEFAULT_TB so the footprint stays VMEM-safe on v7x."""
    if tb is not None:
        return max(ROW_ALIGN, _round_up(tb, ROW_ALIGN))
    if B <= ROW_ALIGN:
        return ROW_ALIGN
    n_tiles = max(2, _cdiv(B, DEFAULT_TB))
    return min(DEFAULT_TB, _round_up(_cdiv(B, n_tiles), ROW_ALIGN))


def generator_shared_net_forward(x, dense_params, tb=None):
    """x: (B, 312) float (f32 or bf16) -> (B, 26) float32 logits.

    dense_params: output of prepare_dense_params (precomputed once).
    tb: optional batch tile override (rows per grid step); raise toward 4096 on
        v5e/v6e for very large batches.
    """
    B = x.shape[0]
    tb = _pick_tb(B, tb)
    Bp = _round_up(B, tb)
    if Bp != B:
        # TODO(synk): for large ragged batches, switch to a masked last tile
        # (scalar-prefetch valid-row count) instead of materializing a padded copy.
        x = jnp.pad(x, ((0, Bp - B), (0, 0)))
    out = _forward_padded(x, dense_params, tb)
    return out[:B, :ALPHABET_LENGTH].astype(jnp.float32)


# -------------------------- reference --------------------------

def reference_forward(x, params):
    """Plain-JAX f32 reference mirroring the PyTorch forward (eval mode)."""
    B = x.shape[0]
    h = x.reshape(B, LETTERS_PER_CONTEXT, ALPHABET_LENGTH)
    h = h @ params["letter1_w"] + params["letter1_b"]
    h = jnp.where(h > 0, h, LEAKY_SLOPE * h)
    h = h @ params["letter2_w"] + params["letter2_b"]
    h = jnp.maximum(h, 0.0)
    h = h.reshape(B, GROUPS_PER_CONTEXT, -1)
    h = h @ params["group_inter_w"] + params["group_inter_b"]
    h = jnp.maximum(h, 0.0)
    h = h @ params["group_out_w"] + params["group_out_b"]
    h = jnp.maximum(h, 0.0)
    h = h.reshape(B, -1)
    h = h @ params["head_inter_w"] + params["head_inter_b"]
    h = jnp.maximum(h, 0.0)
    return h @ params["head_out_w"] + params["head_out_b"]


if __name__ == "__main__":
    key = jax.random.PRNGKey(0)
    k_param, k_x, k_x2 = jax.random.split(key, 3)

    params = make_params(k_param)
    dense = prepare_dense_params(params)   # one-time weight assembly (hoisted)

    # Small batch (exercises single-tile path + ragged padding).
    B = 2
    x = jax.random.uniform(k_x, (B, IN_FEATURES), jnp.float32)
    y = jax.block_until_ready(generator_shared_net_forward(x, dense))
    y_ref = reference_forward(x, params)
    assert y.shape == (B, ALPHABET_LENGTH)
    err = float(jnp.max(jnp.abs(y - y_ref)))
    assert err < 5e-2, f"mismatch vs reference (bf16 path), max abs err = {err}"

    # Slightly larger batch (exercises multi-tile grid).
    B2 = 40
    x2 = jax.random.uniform(k_x2, (B2, IN_FEATURES), jnp.float32)
    y2 = jax.block_until_ready(generator_shared_net_forward(x2, dense))
    y2_ref = reference_forward(x2, params)
    err2 = float(jnp.max(jnp.abs(y2 - y2_ref)))
    assert y2.shape == (B2, ALPHABET_LENGTH)
    assert err2 < 5e-2, f"mismatch vs reference (multi-tile), max abs err = {err2}"

    print("KERNEL_OK")
</pallas_src>

<mosaic_0001>
module attributes {stable_mosaic.version = 11 : i64} {
  func.func @_kernel(%arg0: i32, %arg1: memref<16x312xf32, #tpu.memory_space<vmem>>, %arg2: memref<312x768xbf16, #tpu.memory_space<vmem>>, %arg3: memref<1x768xf32, #tpu.memory_space<vmem>>, %arg4: memref<768x128xbf16, #tpu.memory_space<vmem>>, %arg5: memref<4x128x128xbf16, #tpu.memory_space<vmem>>, %arg6: memref<5x128xf32, #tpu.memory_space<vmem>>, %arg7: memref<16x128xbf16, #tpu.memory_space<vmem>>) attributes {dimension_semantics = [#tpu.dimension_semantics<parallel>], iteration_bounds = array<i64: 1>, scalar_prefetch = 0 : i64, scratch_operands = 0 : i64, tpu.core_type = #tpu.core_type<tc>, window_params = [{transform_indices = @transform_0, window_bounds = array<i64: 16, 312>}, {pipeline_mode = #tpu.pipeline_mode<synchronous>, transform_indices = @transform_1, window_bounds = array<i64: 312, 768>}, {pipeline_mode = #tpu.pipeline_mode<synchronous>, transform_indices = @transform_2, window_bounds = array<i64: 1, 768>}, {pipeline_mode = #tpu.pipeline_mode<synchronous>, transform_indices = @transform_3, window_bounds = array<i64: 768, 128>}, {pipeline_mode = #tpu.pipeline_mode<synchronous>, transform_indices = @transform_4, window_bounds = array<i64: 4, 128, 128>}, {pipeline_mode = #tpu.pipeline_mode<synchronous>, transform_indices = @transform_5, window_bounds = array<i64: 5, 128>}, {transform_indices = @transform_6, window_bounds = array<i64: 16, 128>}]} {
    %c0 = arith.constant 0 : index
    %c0_0 = arith.constant 0 : index
    %0 = vector.load %arg1[%c0, %c0_0] : memref<16x312xf32, #tpu.memory_space<vmem>>, vector<16x312xf32>
    %1 = arith.truncf %0 : vector<16x312xf32> to vector<16x312xbf16>
    %c0_1 = arith.constant 0 : index
    %c0_2 = arith.constant 0 : index
    %2 = vector.load %arg6[%c0_1, %c0_2] : memref<5x128xf32, #tpu.memory_space<vmem>>, vector<5x128xf32>
    %c0_3 = arith.constant 0 : index
    %c0_4 = arith.constant 0 : index
    %3 = vector.load %arg2[%c0_3, %c0_4] : memref<312x768xbf16, #tpu.memory_space<vmem>>, vector<312x768xbf16>
    %cst = arith.constant dense<0.000000e+00> : vector<16x768xf32>
    %4 = tpu.matmul %1, %3, %cst {dimension_numbers = #tpu.dot_dimension_numbers<[1], [0], [0], [1], [0, 0, 1, 1], [], []>} : vector<16x312xbf16>, vector<312x768xbf16>, vector<16x768xf32> -> vector<16x768xf32>
    %c0_5 = arith.constant 0 : index
    %c0_6 = arith.constant 0 : index
    %5 = vector.load %arg3[%c0_5, %c0_6] : memref<1x768xf32, #tpu.memory_space<vmem>>, vector<1x768xf32>
    %6 = vector.broadcast %5 : vector<1x768xf32> to vector<16x768xf32>
    %7 = arith.addf %4, %6 : vector<16x768xf32>
    %cst_7 = arith.constant 0.00999999977 : f32
    %8 = vector.broadcast %cst_7 : f32 to vector<16x768xf32>
    %9 = arith.mulf %8, %7 : vector<16x768xf32>
    %10 = arith.maximumf %7, %9 : vector<16x768xf32>
    %11 = arith.truncf %10 : vector<16x768xf32> to vector<16x768xbf16>
    %c0_8 = arith.constant 0 : index
    %c0_9 = arith.constant 0 : index
    %12 = vector.load %arg4[%c0_8, %c0_9] : memref<768x128xbf16, #tpu.memory_space<vmem>>, vector<768x128xbf16>
    %cst_10 = arith.constant dense<0.000000e+00> : vector<16x128xf32>
    %13 = tpu.matmul %11, %12, %cst_10 {dimension_numbers = #tpu.dot_dimension_numbers<[1], [0], [0], [1], [0, 0, 1, 1], [], []>} : vector<16x768xbf16>, vector<768x128xbf16>, vector<16x128xf32> -> vector<16x128xf32>
    %14 = vector.extract_strided_slice %2 {offsets = [0, 0], sizes = [1, 128], strides = [1, 1]} : vector<5x128xf32> to vector<1x128xf32>
    %15 = vector.broadcast %14 : vector<1x128xf32> to vector<16x128xf32>
    %16 = arith.addf %13, %15 : vector<16x128xf32>
    %cst_11 = arith.constant 0.000000e+00 : f32
    %17 = vector.broadcast %cst_11 : f32 to vector<16x128xf32>
    %18 = arith.maximumf %16, %17 : vector<16x128xf32>
    %19 = arith.truncf %18 : vector<16x128xf32> to vector<16x128xbf16>
    %c0_12 = arith.constant 0 : index
    %c0_13 = arith.constant 0 : index
    %c0_14 = arith.constant 0 : index
    %20 = vector.load %arg5[%c0_12, %c0_13, %c0_14] : memref<4x128x128xbf16, #tpu.memory_space<vmem>>, vector<1x128x128xbf16>
    %21 = vector.shape_cast %20 : vector<1x128x128xbf16> to vector<128x128xbf16>
    %cst_15 = arith.constant dense<0.000000e+00> : vector<16x128xf32>
    %22 = tpu.matmul %19, %21, %cst_15 {dimension_numbers = #tpu.dot_dimension_numbers<[1], [0], [0], [1], [0, 0, 1, 1], [], []>} : vector<16x128xbf16>, vector<128x128xbf16>, vector<16x128xf32> -> vector<16x128xf32>
    %23 = vector.extract_strided_slice %2 {offsets = [1, 0], sizes = [1, 128], strides = [1, 1]} : vector<5x128xf32> to vector<1x128xf32>
    %24 = vector.broadcast %23 : vector<1x128xf32> to vector<16x128xf32>
    %25 = arith.addf %22, %24 : vector<16x128xf32>
    %cst_16 = arith.constant 0.000000e+00 : f32
    %26 = vector.broadcast %cst_16 : f32 to vector<16x128xf32>
    %27 = arith.maximumf %25, %26 : vector<16x128xf32>
    %28 = arith.truncf %27 : vector<16x128xf32> to vector<16x128xbf16>
    %c1 = arith.constant 1 : index
    %c0_17 = arith.constant 0 : index
    %c0_18 = arith.constant 0 : index
    %29 = vector.load %arg5[%c1, %c0_17, %c0_18] : memref<4x128x128xbf16, #tpu.memory_space<vmem>>, vector<1x128x128xbf16>
    %30 = vector.shape_cast %29 : vector<1x128x128xbf16> to vector<128x128xbf16>
    %cst_19 = arith.constant dense<0.000000e+00> : vector<16x128xf32>
    %31 = tpu.matmul %28, %30, %cst_19 {dimension_numbers = #tpu.dot_dimension_numbers<[1], [0], [0], [1], [0, 0, 1, 1], [], []>} : vector<16x128xbf16>, vector<128x128xbf16>, vector<16x128xf32> -> vector<16x128xf32>
    %32 = vector.extract_strided_slice %2 {offsets = [2, 0], sizes = [1, 128], strides = [1, 1]} : vector<5x128xf32> to vector<1x128xf32>
    %33 = vector.broadcast %32 : vector<1x128xf32> to vector<16x128xf32>
    %34 = arith.addf %31, %33 : vector<16x128xf32>
    %cst_20 = arith.constant 0.000000e+00 : f32
    %35 = vector.broadcast %cst_20 : f32 to vector<16x128xf32>
    %36 = arith.maximumf %34, %35 : vector<16x128xf32>
    %37 = arith.truncf %36 : vector<16x128xf32> to vector<16x128xbf16>
    %c2 = arith.constant 2 : index
    %c0_21 = arith.constant 0 : index
    %c0_22 = arith.constant 0 : index
    %38 = vector.load %arg5[%c2, %c0_21, %c0_22] : memref<4x128x128xbf16, #tpu.memory_space<vmem>>, vector<1x128x128xbf16>
    %39 = vector.shape_cast %38 : vector<1x128x128xbf16> to vector<128x128xbf16>
    %cst_23 = arith.constant dense<0.000000e+00> : vector<16x128xf32>
    %40 = tpu.matmul %37, %39, %cst_23 {dimension_numbers = #tpu.dot_dimension_numbers<[1], [0], [0], [1], [0, 0, 1, 1], [], []>} : vector<16x128xbf16>, vector<128x128xbf16>, vector<16x128xf32> -> vector<16x128xf32>
    %41 = vector.extract_strided_slice %2 {offsets = [3, 0], sizes = [1, 128], strides = [1, 1]} : vector<5x128xf32> to vector<1x128xf32>
    %42 = vector.broadcast %41 : vector<1x128xf32> to vector<16x128xf32>
    %43 = arith.addf %40, %42 : vector<16x128xf32>
    %cst_24 = arith.constant 0.000000e+00 : f32
    %44 = vector.broadcast %cst_24 : f32 to vector<16x128xf32>
    %45 = arith.maximumf %43, %44 : vector<16x128xf32>
    %46 = arith.truncf %45 : vector<16x128xf32> to vector<16x128xbf16>
    %c3 = arith.constant 3 : index
    %c0_25 = arith.constant 0 : index
    %c0_26 = arith.constant 0 : index
    %47 = vector.load %arg5[%c3, %c0_25, %c0_26] : memref<4x128x128xbf16, #tpu.memory_space<vmem>>, vector<1x128x128xbf16>
    %48 = vector.shape_cast %47 : vector<1x128x128xbf16> to vector<128x128xbf16>
    %cst_27 = arith.constant dense<0.000000e+00> : vector<16x128xf32>
    %49 = tpu.matmul %46, %48, %cst_27 {dimension_numbers = #tpu.dot_dimension_numbers<[1], [0], [0], [1], [0, 0, 1, 1], [], []>} : vector<16x128xbf16>, vector<128x128xbf16>, vector<16x128xf32> -> vector<16x128xf32>
    %50 = vector.extract_strided_slice %2 {offsets = [4, 0], sizes = [1, 128], strides = [1, 1]} : vector<5x128xf32> to vector<1x128xf32>
    %51 = vector.broadcast %50 : vector<1x128xf32> to vector<16x128xf32>
    %52 = arith.addf %49, %51 : vector<16x128xf32>
    %53 = arith.truncf %52 : vector<16x128xf32> to vector<16x128xbf16>
    %c0_28 = arith.constant 0 : index
    %c0_29 = arith.constant 0 : index
    %54 = vector.load %arg7[%c0_28, %c0_29] : memref<16x128xbf16, #tpu.memory_space<vmem>>, vector<16x128xbf16>
    tpu.vector_store %arg7[%c0_28, %c0_29], %53 {strides = array<i32>} : memref<16x128xbf16, #tpu.memory_space<vmem>>, vector<16x128xbf16>,
    return
  }
  func.func @transform_0(%arg0: i32) -> (i32, i32) {
    %c0_i32 = arith.constant 0 : i32
    %c0_i32_0 = arith.constant 0 : i32
    return %arg0, %c0_i32 : i32, i32
  }
  func.func @transform_1(%arg0: i32) -> (i32, i32) {
    %c0_i32 = arith.constant 0 : i32
    %c0_i32_0 = arith.constant 0 : i32
    %c0_i32_1 = arith.constant 0 : i32
    return %c0_i32, %c0_i32_0 : i32, i32
  }
  func.func @transform_2(%arg0: i32) -> (i32, i32) {
    %c0_i32 = arith.constant 0 : i32
    %c0_i32_0 = arith.constant 0 : i32
    %c0_i32_1 = arith.constant 0 : i32
    return %c0_i32, %c0_i32_0 : i32, i32
  }
  func.func @transform_3(%arg0: i32) -> (i32, i32) {
    %c0_i32 = arith.constant 0 : i32
    %c0_i32_0 = arith.constant 0 : i32
    %c0_i32_1 = arith.constant 0 : i32
    return %c0_i32, %c0_i32_0 : i32, i32
  }
  func.func @transform_4(%arg0: i32) -> (i32, i32, i32) {
    %c0_i32 = arith.constant 0 : i32
    %c0_i32_0 = arith.constant 0 : i32
    %c0_i32_1 = arith.constant 0 : i32
    %c0_i32_2 = arith.constant 0 : i32
    return %c0_i32, %c0_i32_0, %c0_i32_1 : i32, i32, i32
  }
  func.func @transform_5(%arg0: i32) -> (i32, i32) {
    %c0_i32 = arith.constant 0 : i32
    %c0_i32_0 = arith.constant 0 : i32
    %c0_i32_1 = arith.constant 0 : i32
    return %c0_i32, %c0_i32_0 : i32, i32
  }
  func.func @transform_6(%arg0: i32) -> (i32, i32) {
    %c0_i32 = arith.constant 0 : i32
    %c0_i32_0 = arith.constant 0 : i32
    return %arg0, %c0_i32 : i32, i32
  }
}

</mosaic_0001>

<llo_original>
// kernel: _forward_padded.1
$region0: #{_forward_padded.1}
  #allocation0 [shape = 'u32[]', space=smem, size = 0x4, offset = 0x4, fixed_abs, tag = 'smem constant byte address 0x4 - core index']
  #allocation1 [shape = 'u32[144,128]{1,0:T(1,128)}', space=vmem, size = 0x12000, scoped, tag = 'internal scratch']
  %s0 = inlined_call_operand.hbm [shape: f32[16,312], index: 0, kind: input, shape index: {}]
  %s1 = inlined_call_operand.hbm [shape: bf16[312,768], index: 1, kind: input, shape index: {}]
  %s2 = inlined_call_operand.vmem [shape: f32[1,768], index: 2, kind: input, shape index: {}]
  %s3 = inlined_call_operand.hbm [shape: bf16[768,128], index: 3, kind: input, shape index: {}]
  %s4 = inlined_call_operand.hbm [shape: bf16[4,128,128], index: 4, kind: input, shape index: {}]
  %s5 = inlined_call_operand.vmem [shape: f32[5,128], index: 5, kind: input, shape index: {}]
  %s6 = inlined_call_operand.hbm [shape: bf16[16,128], index: 6, kind: output, shape index: {}]
  %s7 = sld [smem:[#allocation0]]
  $region50: #{_forward_padded.1} parent=0
    _
  %s9 = ssub.s32 1, %s7
  %s10 = scalar_select 0, %s9, %s7
  $region1: #{_forward_padded.1} parent=0
    #allocation2 [shape = 'u8[24576]{0}', space=vmem, size = 0x6000, scoped, tag = 'input window, operand 0, single buffered']
    #allocation3 [shape = 's32[1]{0}', space=sflag, size = 0x4, scoped, tag = 'scoped memory for _forward_padded.1']
    #allocation4 [shape = 's32[1]{0}', space=sflag, size = 0x4, scoped, tag = 'scoped memory for _forward_padded.1']
    #allocation5 [shape = 'u8[479232]{0}', space=vmem, size = 0x75000, scoped, tag = 'input window, operand 1, single buffered']
    #allocation6 [shape = 's32[1]{0}', space=sflag, size = 0x4, scoped, tag = 'scoped memory for _forward_padded.1']
    #allocation7 [shape = 'u8[196608]{0}', space=vmem, size = 0x30000, scoped, tag = 'input window, operand 3, single buffered']
    #allocation8 [shape = 'u8[131072]{0}', space=vmem, size = 0x20000, scoped, tag = 'input window, operand 4, single buffered']
    #allocation9 [shape = 's32[1]{0}', space=sflag, size = 0x4, scoped, tag = 'scoped memory for _forward_padded.1']
    #allocation10 [shape = 'u8[4096]{0}', space=vmem, size = 0x1000, scoped, tag = 'output window, operand 0, single buffered']
    %11 = vsyncpa [#allocation3], 0
    %12 = vsyncpa [#allocation6], 0
    %13 = vsyncpa [#allocation9], 0
    %14 = vsyncpa [#allocation4], 0
    // Predicated region
    $region2: #{_forward_padded.1} parent=1 // pred_check
      _
    $region3: #{_forward_padded.1} parent=1 // pred_check_branch
      %16 = sbr.rel (0) target = $region5
    $region4: #{_forward_padded.1} parent=1 // pred_region
      %s18 = ssub.s32 768, 768
      %19 = vsyncadd [#allocation3], %s18
      %s20 = sshll.u32 [#allocation2], 4
      %s21 = int_to_ptr.vmem [resolvable:$true] %s20
      %26 = dma.hbm_to_vmem [thread:$0]  %s0, 768, %s21, [#allocation3], 384, 384, 24
    $region5: #{_forward_padded.1} parent=1 // pred_fallthru
      _
    // Predicated region
    $region6: #{_forward_padded.1} parent=1 // pred_check
      _
    $region7: #{_forward_padded.1} parent=1 // pred_check_branch
      %28 = sbr.rel (0) target = $region9
    $region8: #{_forward_padded.1} parent=1 // pred_region
      %s30 = ssub.s32 14976, 14976
      %31 = vsyncadd [#allocation6], %s30
      %s32 = sshll.u32 [#allocation5], 4
      %s33 = int_to_ptr.vmem [resolvable:$true] %s32
      %38 = dma.hbm_to_vmem [thread:$0]  %s1, 14976, %s33, [#allocation6], 384, 384, 24
    $region9: #{_forward_padded.1} parent=1 // pred_fallthru
      _
    // Predicated region
    $region10: #{_forward_padded.1} parent=1 // pred_check
      _
    $region11: #{_forward_padded.1} parent=1 // pred_check_branch
      %40 = sbr.rel (0) target = $region13
    $region12: #{_forward_padded.1} parent=1 // pred_region
      _
    $region13: #{_forward_padded.1} parent=1 // pred_fallthru
      _
    // Predicated region
    $region14: #{_forward_padded.1} parent=1 // pred_check
      _
    $region15: #{_forward_padded.1} parent=1 // pred_check_branch
      %42 = sbr.rel (0) target = $region17
    $region16: #{_forward_padded.1} parent=1 // pred_region
      %s44 = ssub.s32 6144, 6144
      %45 = vsyncadd [#allocation6], %s44
      %s46 = sshll.u32 [#allocation7], 4
      %s47 = int_to_ptr.vmem [resolvable:$true] %s46
      %52 = dma.hbm_to_vmem [thread:$0]  %s3, 6144, %s47, [#allocation6], 64, 64, 4
    $region17: #{_forward_padded.1} parent=1 // pred_fallthru
      _
    // Predicated region
    $region18: #{_forward_padded.1} parent=1 // pred_check
      _
    $region19: #{_forward_padded.1} parent=1 // pred_check_branch
      %54 = sbr.rel (0) target = $region21
    $region20: #{_forward_padded.1} parent=1 // pred_region
      %s56 = ssub.s32 4096, 4096
      %57 = vsyncadd [#allocation9], %s56
      %s58 = sshll.u32 [#allocation8], 4
      %s59 = int_to_ptr.vmem [resolvable:$true] %s58
      %64 = dma.hbm_to_vmem [thread:$0]  %s4, 4096, %s59, [#allocation9], 64, 64, 4
    $region21: #{_forward_padded.1} parent=1 // pred_fallthru
      _
    // Predicated region
    $region22: #{_forward_padded.1} parent=1 // pred_check
      _
    $region23: #{_forward_padded.1} parent=1 // pred_check_branch
      %66 = sbr.rel (0) target = $region25
    $region24: #{_forward_padded.1} parent=1 // pred_region
      _
    $region25: #{_forward_padded.1} parent=1 // pred_fallthru
      _
    // Predicated region
    $region26: #{_forward_padded.1} parent=1 // pred_check
      _
    $region27: #{_forward_padded.1} parent=1 // pred_check_branch
      %68 = sbr.rel (0) target = $region29
    $region28: #{_forward_padded.1} parent=1 // pred_region
      %69 = dma.done [#allocation3], 768
    $region29: #{_forward_padded.1} parent=1 // pred_fallthru
      _
    // Predicated region
    $region30: #{_forward_padded.1} parent=1 // pred_check
      _
    $region31: #{_forward_padded.1} parent=1 // pred_check_branch
      %71 = sbr.rel (0) target = $region33
    $region32: #{_forward_padded.1} parent=1 // pred_region
      %72 = dma.done [#allocation6], 14976
    $region33: #{_forward_padded.1} parent=1 // pred_fallthru
      _
    // Predicated region
    $region34: #{_forward_padded.1} parent=1 // pred_check
      _
    $region35: #{_forward_padded.1} parent=1 // pred_check_branch
      %74 = sbr.rel (0) target = $region37
    $region36: #{_forward_padded.1} parent=1 // pred_region
      %75 = dma.done [#allocation6], 6144
    $region37: #{_forward_padded.1} parent=1 // pred_fallthru
      _
    // Predicated region
    $region38: #{_forward_padded.1} parent=1 // pred_check
      _
    $region39: #{_forward_padded.1} parent=1 // pred_check_branch
      %77 = sbr.rel (0) target = $region41
    $region40: #{_forward_padded.1} parent=1 // pred_region
      %78 = dma.done [#allocation9], 4096
    $region41: #{_forward_padded.1} parent=1 // pred_fallthru
      _
    %v80 = vld [vmem:[#allocation2] sm:$0xff]
    %v81 = vld [vmem:[#allocation2 + $0x8] sm:$0xff]
    %v82 = vld [vmem:[#allocation2 + $0x10] sm:$0xff]
    %v83 = vld [vmem:[#allocation2 + $0x18] sm:$0xff]
    %v84 = vld [vmem:[#allocation2 + $0x20] sm:$0xff]
    %v85 = vld [vmem:[#allocation2 + $0x28] sm:$0xff]
    %v86 = vpack.c.bf16 %v83, %v80
    %v87 = vpack.c.bf16 %v84, %v81
    %v88 = vpack.c.bf16 %v85, %v82
    %v89 = vld [vmem:[%s5] sm:$0x1f]
    %v90 = vld [vmem:[#allocation5] sm:$0xff]
    %v91 = vld [vmem:[#allocation5 + $0x8] sm:$0xff]
    %v92 = vld [vmem:[#allocation5 + $0x10] sm:$0xff]
    %v93 = vld [vmem:[#allocation5 + $0x18] sm:$0xff]
    %v94 = vld [vmem:[#allocation5 + $0x20] sm:$0xff]
    %v95 = vld [vmem:[#allocation5 + $0x28] sm:$0xff]
    %v96 = vld [vmem:[#allocation5 + $0x30] sm:$0xff]
    %v97 = vld [vmem:[#allocation5 + $0x38] sm:$0xff]
    %v98 = vld [vmem:[#allocation5 + $0x40] sm:$0xff]
    %v99 = vld [vmem:[#allocation5 + $0x48] sm:$0xff]
    %v100 = vld [vmem:[#allocation5 + $0x50] sm:$0xff]
    %v101 = vld [vmem:[#allocation5 + $0x58] sm:$0xff]
    %v102 = vld [vmem:[#allocation5 + $0x60] sm:$0xff]
    %v103 = vld [vmem:[#allocation5 + $0x68] sm:$0xff]
    %v104 = vld [vmem:[#allocation5 + $0x70] sm:$0xff]
    %v105 = vld [vmem:[#allocation5 + $0x78] sm:$0xff]
    %v106 = vld [vmem:[#allocation5 + $0x80] sm:$0xff]
    %v107 = vld [vmem:[#allocation5 + $0x88] sm:$0xff]
    %v108 = vld [vmem:[#allocation5 + $0x90] sm:$0xff]
    %v109 = vld [vmem:[#allocation5 + $0x98] sm:$0xff]
    %v110 = vld [vmem:[#allocation5 + $0xa0] sm:$0xff]
    %v111 = vld [vmem:[#allocation5 + $0xa8] sm:$0xff]
    %v112 = vld [vmem:[#allocation5 + $0xb0] sm:$0xff]
    %v113 = vld [vmem:[#allocation5 + $0xb8] sm:$0xff]
    %v114 = vld [vmem:[#allocation5 + $0xc0] sm:$0xff]
    %v115 = vld [vmem:[#allocation5 + $0xc8] sm:$0xff]
    %v116 = vld [vmem:[#allocation5 + $0xd0] sm:$0xff]
    %v117 = vld [vmem:[#allocation5 + $0xd8] sm:$0xff]
    %v118 = vld [vmem:[#allocation5 + $0xe0] sm:$0xff]
    %v119 = vld [vmem:[#allocation5 + $0xe8] sm:$0xff]
    %v120 = vld [vmem:[#allocation5 + $0xf0] sm:$0xff]
    %v121 = vld [vmem:[#allocation5 + $0xf8] sm:$0xff]
    %v122 = vld [vmem:[#allocation5 + $0x100] sm:$0xff]
    %v123 = vld [vmem:[#allocation5 + $0x108] sm:$0xff]
    %v124 = vld [vmem:[#allocation5 + $0x110] sm:$0xff]
    %v125 = vld [vmem:[#allocation5 + $0x118] sm:$0xff]
    %v126 = vld [vmem:[#allocation5 + $0x120] sm:$0xff]
    %v127 = vld [vmem:[#allocation5 + $0x128] sm:$0xff]
    %v128 = vld [vmem:[#allocation5 + $0x130] sm:$0xff]
    %v129 = vld [vmem:[#allocation5 + $0x138] sm:$0xff]
    %v130 = vld [vmem:[#allocation5 + $0x140] sm:$0xff]
    %v131 = vld [vmem:[#allocation5 + $0x148] sm:$0xff]
    %v132 = vld [vmem:[#allocation5 + $0x150] sm:$0xff]
    %v133 = vld [vmem:[#allocation5 + $0x158] sm:$0xff]
    %v134 = vld [vmem:[#allocation5 + $0x160] sm:$0xff]
    %v135 = vld [vmem:[#allocation5 + $0x168] sm:$0xff]
    %v136 = vld [vmem:[#allocation5 + $0x170] sm:$0xff]
    %v137 = vld [vmem:[#allocation5 + $0x178] sm:$0xff]
    %v138 = vld [vmem:[#allocation5 + $0x180] sm:$0xff]
    %v139 = vld [vmem:[#allocation5 + $0x188] sm:$0xff]
    %v140 = vld [vmem:[#allocation5 + $0x190] sm:$0xff]
    %v141 = vld [vmem:[#allocation5 + $0x198] sm:$0xff]
    %v142 = vld [vmem:[#allocation5 + $0x1a0] sm:$0xff]
    %v143 = vld [vmem:[#allocation5 + $0x1a8] sm:$0xff]
    %v144 = vld [vmem:[#allocation5 + $0x1b0] sm:$0xff]
    %v145 = vld [vmem:[#allocation5 + $0x1b8] sm:$0xff]
    %v146 = vld [vmem:[#allocation5 + $0x1c0] sm:$0xff]
    %v147 = vld [vmem:[#allocation5 + $0x1c8] sm:$0xff]
    %v148 = vld [vmem:[#allocation5 + $0x1d0] sm:$0xff]
    %v149 = vld [vmem:[#allocation5 + $0x1d8] sm:$0xff]
    %v150 = vld [vmem:[#allocation5 + $0x1e0] sm:$0xff]
    %v151 = vld [vmem:[#allocation5 + $0x1e8] sm:$0xff]
    %v152 = vld [vmem:[#allocation5 + $0x1f0] sm:$0xff]
    %v153 = vld [vmem:[#allocation5 + $0x1f8] sm:$0xff]
    %v154 = vld [vmem:[#allocation5 + $0x200] sm:$0xff]
    %v155 = vld [vmem:[#allocation5 + $0x208] sm:$0xff]
    %v156 = vld [vmem:[#allocation5 + $0x210] sm:$0xff]
    %v157 = vld [vmem:[#allocation5 + $0x218] sm:$0xff]
    %v158 = vld [vmem:[#allocation5 + $0x220] sm:$0xff]
    %v159 = vld [vmem:[#allocation5 + $0x228] sm:$0xff]
    %v160 = vld [vmem:[#allocation5 + $0x230] sm:$0xff]
    %v161 = vld [vmem:[#allocation5 + $0x238] sm:$0xff]
    %v162 = vld [vmem:[#allocation5 + $0x240] sm:$0xff]
    %v163 = vld [vmem:[#allocation5 + $0x248] sm:$0xff]
    %v164 = vld [vmem:[#allocation5 + $0x250] sm:$0xff]
    %v165 = vld [vmem:[#allocation5 + $0x258] sm:$0xff]
    %v166 = vld [vmem:[#allocation5 + $0x260] sm:$0xff]
    %v167 = vld [vmem:[#allocation5 + $0x268] sm:$0xff]
    %v168 = vld [vmem:[#allocation5 + $0x270] sm:$0xff]
    %v169 = vld [vmem:[#allocation5 + $0x278] sm:$0xff]
    %v170 = vld [vmem:[#allocation5 + $0x280] sm:$0xff]
    %v171 = vld [vmem:[#allocation5 + $0x288] sm:$0xff]
    %v172 = vld [vmem:[#allocation5 + $0x290] sm:$0xff]
    %v173 = vld [vmem:[#allocation5 + $0x298] sm:$0xff]
    %v174 = vld [vmem:[#allocation5 + $0x2a0] sm:$0xff]
    %v175 = vld [vmem:[#allocation5 + $0x2a8] sm:$0xff]
    %v176 = vld [vmem:[#allocation5 + $0x2b0] sm:$0xff]
    %v177 = vld [vmem:[#allocation5 + $0x2b8] sm:$0xff]
    %v178 = vld [vmem:[#allocation5 + $0x2c0] sm:$0xff]
    %v179 = vld [vmem:[#allocation5 + $0x2c8] sm:$0xff]
    %v180 = vld [vmem:[#allocation5 + $0x2d0] sm:$0xff]
    %v181 = vld [vmem:[#allocation5 + $0x2d8] sm:$0xff]
    %v182 = vld [vmem:[#allocation5 + $0x2e0] sm:$0xff]
    %v183 = vld [vmem:[#allocation5 + $0x2e8] sm:$0xff]
    %v184 = vld [vmem:[#allocation5 + $0x2f0] sm:$0xff]
    %v185 = vld [vmem:[#allocation5 + $0x2f8] sm:$0xff]
    %v186 = vld [vmem:[#allocation5 + $0x300] sm:$0xff]
    %v187 = vld [vmem:[#allocation5 + $0x308] sm:$0xff]
    %v188 = vld [vmem:[#allocation5 + $0x310] sm:$0xff]
    %v189 = vld [vmem:[#allocation5 + $0x318] sm:$0xff]
    %v190 = vld [vmem:[#allocation5 + $0x320] sm:$0xff]
    %v191 = vld [vmem:[#allocation5 + $0x328] sm:$0xff]
    %v192 = vld [vmem:[#allocation5 + $0x330] sm:$0xff]
    %v193 = vld [vmem:[#allocation5 + $0x338] sm:$0xff]
    %v194 = vld [vmem:[#allocation5 + $0x340] sm:$0xff]
    %v195 = vld [vmem:[#allocation5 + $0x348] sm:$0xff]
    %v196 = vld [vmem:[#allocation5 + $0x350] sm:$0xff]
    %v197 = vld [vmem:[#allocation5 + $0x358] sm:$0xff]
    %v198 = vld [vmem:[#allocation5 + $0x360] sm:$0xff]
    %v199 = vld [vmem:[#allocation5 + $0x368] sm:$0xff]
    %v200 = vld [vmem:[#allocation5 + $0x370] sm:$0xff]
    %v201 = vld [vmem:[#allocation5 + $0x378] sm:$0xff]
    %v202 = vld [vmem:[#allocation5 + $0x380] sm:$0xff]
    %v203 = vld [vmem:[#allocation5 + $0x388] sm:$0xff]
    %v204 = vld [vmem:[#allocation5 + $0x390] sm:$0xff]
    %v205 = vld [vmem:[#allocation5 + $0x398] sm:$0xff]
    %v206 = vld [vmem:[#allocation5 + $0x3a0] sm:$0xff]
    %v207 = vld [vmem:[%s2] sm:$0x3f]
    %v209 = vlaneseq
    %v210 = vshrl.u32 %v209, 7
    %v211 = vsub.s32 0, %v210
    %v212 = vrot.slane %v207, %v211
    %v213 = vlaneseq
    %v214 = vshrl.u32 %v213, 7
    %v215 = vsub.s32 1, %v214
    %v216 = vrot.slane %v207, %v215
    %v217 = vlaneseq
    %v218 = vshrl.u32 %v217, 7
    %v219 = vsub.s32 2, %v218
    %v220 = vrot.slane %v207, %v219
    %v221 = vlaneseq
    %v222 = vshrl.u32 %v221, 7
    %v223 = vsub.s32 3, %v222
    %v224 = vrot.slane %v207, %v223
    %v225 = vlaneseq
    %v226 = vshrl.u32 %v225, 7
    %v227 = vsub.s32 4, %v226
    %v228 = vrot.slane %v207, %v227
    %v229 = vlaneseq
    %v230 = vshrl.u32 %v229, 7
    %v231 = vsub.s32 5, %v230
    %v232 = vrot.slane %v207, %v231
    %v356 = vunpack.c.l.b16 %v90
    %v357 = vunpack.c.h.b16 %v90
    %v358 = vunpack.c.l.b16 %v91
    %v359 = vunpack.c.h.b16 %v91
    %v360 = vunpack.c.l.b16 %v92
    %v361 = vunpack.c.h.b16 %v92
    %v362 = vunpack.c.l.b16 %v93
    %v363 = vunpack.c.h.b16 %v93
    %v364 = vunpack.c.l.b16 %v94
    %v365 = vunpack.c.h.b16 %v94
    %v366 = vunpack.c.l.b16 %v95
    %v367 = vunpack.c.h.b16 %v95
    %v368 = vunpack.c.l.b16 %v96
    %v369 = vunpack.c.h.b16 %v96
    %v370 = vunpack.c.l.b16 %v97
    %v371 = vunpack.c.h.b16 %v97
    %v372 = vunpack.c.l.b16 %v98
    %v373 = vunpack.c.h.b16 %v98
    %v374 = vunpack.c.l.b16 %v99
    %v375 = vunpack.c.h.b16 %v99
    %v376 = vunpack.c.l.b16 %v100
    %v377 = vunpack.c.h.b16 %v100
    %v378 = vunpack.c.l.b16 %v101
    %v379 = vunpack.c.h.b16 %v101
    %v380 = vunpack.c.l.b16 %v102
    %v381 = vunpack.c.h.b16 %v102
    %v382 = vunpack.c.l.b16 %v103
    %v383 = vunpack.c.h.b16 %v103
    %v384 = vunpack.c.l.b16 %v104
    %v385 = vunpack.c.h.b16 %v104
    %v386 = vunpack.c.l.b16 %v105
    %v387 = vunpack.c.h.b16 %v105
    %v388 = vunpack.c.l.b16 %v106
    %v389 = vunpack.c.h.b16 %v106
    %v390 = vunpack.c.l.b16 %v107
    %v391 = vunpack.c.h.b16 %v107
    %v392 = vunpack.c.l.b16 %v108
    %v393 = vunpack.c.h.b16 %v108
    %v394 = vunpack.c.l.b16 %v109
    %v395 = vunpack.c.h.b16 %v109
    %v396 = vunpack.c.l.b16 %v110
    %v397 = vunpack.c.h.b16 %v110
    %v398 = vunpack.c.l.b16 %v111
    %v399 = vunpack.c.h.b16 %v111
    %v400 = vunpack.c.l.b16 %v112
    %v401 = vunpack.c.h.b16 %v112
    %v402 = vunpack.c.l.b16 %v113
    %v403 = vunpack.c.h.b16 %v113
    %v404 = vunpack.c.l.b16 %v114
    %v405 = vunpack.c.h.b16 %v114
    %v406 = vunpack.c.l.b16 %v115
    %v407 = vunpack.c.h.b16 %v115
    %v408 = vunpack.c.l.b16 %v116
    %v409 = vunpack.c.h.b16 %v116
    %v410 = vunpack.c.l.b16 %v117
    %v411 = vunpack.c.h.b16 %v117
    %v412 = vunpack.c.l.b16 %v118
    %v413 = vunpack.c.h.b16 %v118
    %v414 = vunpack.c.l.b16 %v119
    %v415 = vunpack.c.h.b16 %v119
    %v416 = vunpack.c.l.b16 %v120
    %v417 = vunpack.c.h.b16 %v120
    %v418 = vunpack.c.l.b16 %v121
    %v419 = vunpack.c.h.b16 %v121
    %v420 = vunpack.c.l.b16 %v122
    %v421 = vunpack.c.h.b16 %v122
    %v422 = vunpack.c.l.b16 %v123
    %v423 = vunpack.c.h.b16 %v123
    %v424 = vunpack.c.l.b16 %v124
    %v425 = vunpack.c.h.b16 %v124
    %v426 = vunpack.c.l.b16 %v125
    %v427 = vunpack.c.h.b16 %v125
    %v428 = vunpack.c.l.b16 %v126
    %v429 = vunpack.c.h.b16 %v126
    %v430 = vunpack.c.l.b16 %v127
    %v431 = vunpack.c.h.b16 %v127
    %v432 = vunpack.c.l.b16 %v128
    %v433 = vunpack.c.h.b16 %v128
    %v434 = vunpack.c.l.b16 %v129
    %v435 = vunpack.c.h.b16 %v129
    %v436 = vunpack.c.l.b16 %v130
    %v437 = vunpack.c.h.b16 %v130
    %v438 = vunpack.c.l.b16 %v131
    %v439 = vunpack.c.h.b16 %v131
    %v440 = vunpack.c.l.b16 %v132
    %v441 = vunpack.c.h.b16 %v132
    %v442 = vunpack.c.l.b16 %v133
    %v443 = vunpack.c.h.b16 %v133
    %v444 = vunpack.c.l.b16 %v134
    %v445 = vunpack.c.h.b16 %v134
    %v446 = vunpack.c.l.b16 %v135
    %v447 = vunpack.c.h.b16 %v135
    %v448 = vunpack.c.l.b16 %v136
    %v449 = vunpack.c.h.b16 %v136
    %v450 = vunpack.c.l.b16 %v137
    %v451 = vunpack.c.h.b16 %v137
    %v452 = vunpack.c.l.b16 %v138
    %v453 = vunpack.c.h.b16 %v138
    %v454 = vunpack.c.l.b16 %v139
    %v455 = vunpack.c.h.b16 %v139
    %v456 = vunpack.c.l.b16 %v140
    %v457 = vunpack.c.h.b16 %v140
    %v458 = vunpack.c.l.b16 %v141
    %v459 = vunpack.c.h.b16 %v141
    %v460 = vunpack.c.l.b16 %v142
    %v461 = vunpack.c.h.b16 %v142
    %v462 = vunpack.c.l.b16 %v143
    %v463 = vunpack.c.h.b16 %v143
    %v464 = vunpack.c.l.b16 %v144
    %v465 = vunpack.c.h.b16 %v144
    %v466 = vunpack.c.l.b16 %v145
    %v467 = vunpack.c.h.b16 %v145
    %v468 = vunpack.c.l.b16 %v146
    %v469 = vunpack.c.h.b16 %v146
    %v470 = vunpack.c.l.b16 %v147
    %v471 = vunpack.c.h.b16 %v147
    %v472 = vunpack.c.l.b16 %v148
    %v473 = vunpack.c.h.b16 %v148
    %v474 = vunpack.c.l.b16 %v149
    %v475 = vunpack.c.h.b16 %v149
    %v476 = vunpack.c.l.b16 %v150
    %v477 = vunpack.c.h.b16 %v150
    %v478 = vunpack.c.l.b16 %v151
    %v479 = vunpack.c.h.b16 %v151
    %v480 = vunpack.c.l.b16 %v152
    %v481 = vunpack.c.h.b16 %v152
    %v482 = vunpack.c.l.b16 %v153
    %v483 = vunpack.c.h.b16 %v153
    %v484 = vunpack.c.l.b16 %v154
    %v485 = vunpack.c.h.b16 %v154
    %v486 = vunpack.c.l.b16 %v155
    %v487 = vunpack.c.h.b16 %v155
    %v488 = vunpack.c.l.b16 %v156
    %v489 = vunpack.c.h.b16 %v156
    %v490 = vunpack.c.l.b16 %v157
    %v491 = vunpack.c.h.b16 %v157
    %v492 = vunpack.c.l.b16 %v158
    %v493 = vunpack.c.h.b16 %v158
    %v494 = vunpack.c.l.b16 %v159
    %v495 = vunpack.c.h.b16 %v159
    %v496 = vunpack.c.l.b16 %v160
    %v497 = vunpack.c.h.b16 %v160
    %v498 = vunpack.c.l.b16 %v161
    %v499 = vunpack.c.h.b16 %v161
    %v500 = vunpack.c.l.b16 %v162
    %v501 = vunpack.c.h.b16 %v162
    %v502 = vunpack.c.l.b16 %v163
    %v503 = vunpack.c.h.b16 %v163
    %v504 = vunpack.c.l.b16 %v164
    %v505 = vunpack.c.h.b16 %v164
    %v506 = vunpack.c.l.b16 %v165
    %v507 = vunpack.c.h.b16 %v165
    %v508 = vunpack.c.l.b16 %v166
    %v509 = vunpack.c.h.b16 %v166
    %v510 = vunpack.c.l.b16 %v167
    %v511 = vunpack.c.h.b16 %v167
    %v512 = vunpack.c.l.b16 %v168
    %v513 = vunpack.c.h.b16 %v168
    %v514 = vunpack.c.l.b16 %v169
    %v515 = vunpack.c.h.b16 %v169
    %v516 = vunpack.c.l.b16 %v170
    %v517 = vunpack.c.h.b16 %v170
    %v518 = vunpack.c.l.b16 %v171
    %v519 = vunpack.c.h.b16 %v171
    %v520 = vunpack.c.l.b16 %v172
    %v521 = vunpack.c.h.b16 %v172
    %v522 = vunpack.c.l.b16 %v173
    %v523 = vunpack.c.h.b16 %v173
    %v524 = vunpack.c.l.b16 %v174
    %v525 = vunpack.c.h.b16 %v174
    %v526 = vunpack.c.l.b16 %v175
    %v527 = vunpack.c.h.b16 %v175
    %v528 = vunpack.c.l.b16 %v176
    %v529 = vunpack.c.h.b16 %v176
    %v530 = vunpack.c.l.b16 %v177
    %v531 = vunpack.c.h.b16 %v177
    %v532 = vunpack.c.l.b16 %v178
    %v533 = vunpack.c.h.b16 %v178
    %v534 = vunpack.c.l.b16 %v179
    %v535 = vunpack.c.h.b16 %v179
    %v536 = vunpack.c.l.b16 %v180
    %v537 = vunpack.c.h.b16 %v180
    %v538 = vunpack.c.l.b16 %v181
    %v539 = vunpack.c.h.b16 %v181
    %v540 = vunpack.c.l.b16 %v182
    %v541 = vunpack.c.h.b16 %v182
    %v542 = vunpack.c.l.b16 %v183
    %v543 = vunpack.c.h.b16 %v183
    %v544 = vunpack.c.l.b16 %v184
    %v545 = vunpack.c.h.b16 %v184
    %v546 = vunpack.c.l.b16 %v185
    %v547 = vunpack.c.h.b16 %v185
    %v548 = vunpack.c.l.b16 %v186
    %v549 = vunpack.c.h.b16 %v186
    %v550 = vunpack.c.l.b16 %v187
    %v551 = vunpack.c.h.b16 %v187
    %v552 = vunpack.c.l.b16 %v188
    %v553 = vunpack.c.h.b16 %v188
    %v554 = vunpack.c.l.b16 %v189
    %v555 = vunpack.c.h.b16 %v189
    %v556 = vunpack.c.l.b16 %v190
    %v557 = vunpack.c.h.b16 %v190
    %v558 = vunpack.c.l.b16 %v191
    %v559 = vunpack.c.h.b16 %v191
    %v560 = vunpack.c.l.b16 %v192
    %v561 = vunpack.c.h.b16 %v192
    %v562 = vunpack.c.l.b16 %v193
    %v563 = vunpack.c.h.b16 %v193
    %v564 = vunpack.c.l.b16 %v194
    %v565 = vunpack.c.h.b16 %v194
    %v566 = vunpack.c.l.b16 %v195
    %v567 = vunpack.c.h.b16 %v195
    %v568 = vunpack.c.l.b16 %v196
    %v569 = vunpack.c.h.b16 %v196
    %v570 = vunpack.c.l.b16 %v197
    %v571 = vunpack.c.h.b16 %v197
    %v572 = vunpack.c.l.b16 %v198
    %v573 = vunpack.c.h.b16 %v198
    %v574 = vunpack.c.l.b16 %v199
    %v575 = vunpack.c.h.b16 %v199
    %v576 = vunpack.c.l.b16 %v200
    %v577 = vunpack.c.h.b16 %v200
    %v578 = vunpack.c.l.b16 %v201
    %v579 = vunpack.c.h.b16 %v201
    %v580 = vunpack.c.l.b16 %v202
    %v581 = vunpack.c.h.b16 %v202
    %v582 = vunpack.c.l.b16 %v203
    %v583 = vunpack.c.h.b16 %v203
    %v584 = vunpack.c.l.b16 %v204
    %v585 = vunpack.c.h.b16 %v204
    %v586 = vunpack.c.l.b16 %v205
    %v587 = vunpack.c.h.b16 %v205
    %v588 = vunpack.c.l.b16 %v206
    %v589 = vunpack.c.h.b16 %v206
    %v590 = vpack.c.b16 %v362, %v356
    %v591 = vpack.c.b16 %v363, %v357
    %v592 = vpack.c.b16 %v364, %v358
    %v593 = vpack.c.b16 %v365, %v359
    %v594 = vpack.c.b16 %v366, %v360
    %v595 = vpack.c.b16 %v367, %v361
    %v596 = vpack.c.b16 %v374, %v368
    %v597 = vpack.c.b16 %v375, %v369
    %v598 = vpack.c.b16 %v376, %v370
    %v599 = vpack.c.b16 %v377, %v371
    %v600 = vpack.c.b16 %v378, %v372
    %v601 = vpack.c.b16 %v379, %v373
    %v602 = vpack.c.b16 %v386, %v380
    %v603 = vpack.c.b16 %v387, %v381
    %v604 = vpack.c.b16 %v388, %v382
    %v605 = vpack.c.b16 %v389, %v383
    %v606 = vpack.c.b16 %v390, %v384
    %v607 = vpack.c.b16 %v391, %v385
    %v608 = vpack.c.b16 %v398, %v392
    %v609 = vpack.c.b16 %v399, %v393
    %v610 = vpack.c.b16 %v400, %v394
    %v611 = vpack.c.b16 %v401, %v395
    %v612 = vpack.c.b16 %v402, %v396
    %v613 = vpack.c.b16 %v403, %v397
    %v614 = vpack.c.b16 %v410, %v404
    %v615 = vpack.c.b16 %v411, %v405
    %v616 = vpack.c.b16 %v412, %v406
    %v617 = vpack.c.b16 %v413, %v407
    %v618 = vpack.c.b16 %v414, %v408
    %v619 = vpack.c.b16 %v415, %v409
    %v620 = vpack.c.b16 %v422, %v416
    %v621 = vpack.c.b16 %v423, %v417
    %v622 = vpack.c.b16 %v424, %v418
    %v623 = vpack.c.b16 %v425, %v419
    %v624 = vpack.c.b16 %v426, %v420
    %v625 = vpack.c.b16 %v427, %v421
    %v626 = vpack.c.b16 %v434, %v428
    %v627 = vpack.c.b16 %v435, %v429
    %v628 = vpack.c.b16 %v436, %v430
    %v629 = vpack.c.b16 %v437, %v431
    %v630 = vpack.c.b16 %v438, %v432
    %v631 = vpack.c.b16 %v439, %v433
    %v632 = vpack.c.b16 %v446, %v440
    %v633 = vpack.c.b16 %v447, %v441
    %v634 = vpack.c.b16 %v448, %v442
    %v635 = vpack.c.b16 %v449, %v443
    %v636 = vpack.c.b16 %v450, %v444
    %v637 = vpack.c.b16 %v451, %v445
    %v638 = vpack.c.b16 %v458, %v452
    %v639 = vpack.c.b16 %v459, %v453
    %v640 = vpack.c.b16 %v460, %v454
    %v641 = vpack.c.b16 %v461, %v455
    %v642 = vpack.c.b16 %v462, %v456
    %v643 = vpack.c.b16 %v463, %v457
    %v644 = vpack.c.b16 %v470, %v464
    %v645 = vpack.c.b16 %v471, %v465
    %v646 = vpack.c.b16 %v472, %v466
    %v647 = vpack.c.b16 %v473, %v467
    %v648 = vpack.c.b16 %v474, %v468
    %v649 = vpack.c.b16 %v475, %v469
    %v650 = vpack.c.b16 %v482, %v476
    %v651 = vpack.c.b16 %v483, %v477
    %v652 = vpack.c.b16 %v484, %v478
    %v653 = vpack.c.b16 %v485, %v479
    %v654 = vpack.c.b16 %v486, %v480
    %v655 = vpack.c.b16 %v487, %v481
    %v656 = vpack.c.b16 %v494, %v488
    %v657 = vpack.c.b16 %v495, %v489
    %v658 = vpack.c.b16 %v496, %v490
    %v659 = vpack.c.b16 %v497, %v491
    %v660 = vpack.c.b16 %v498, %v492
    %v661 = vpack.c.b16 %v499, %v493
    %v662 = vpack.c.b16 %v506, %v500
    %v663 = vpack.c.b16 %v507, %v501
    %v664 = vpack.c.b16 %v508, %v502
    %v665 = vpack.c.b16 %v509, %v503
    %v666 = vpack.c.b16 %v510, %v504
    %v667 = vpack.c.b16 %v511, %v505
    %v668 = vpack.c.b16 %v518, %v512
    %v669 = vpack.c.b16 %v519, %v513
    %v670 = vpack.c.b16 %v520, %v514
    %v671 = vpack.c.b16 %v521, %v515
    %v672 = vpack.c.b16 %v522, %v516
    %v673 = vpack.c.b16 %v523, %v517
    %v674 = vpack.c.b16 %v530, %v524
    %v675 = vpack.c.b16 %v531, %v525
    %v676 = vpack.c.b16 %v532, %v526
    %v677 = vpack.c.b16 %v533, %v527
    %v678 = vpack.c.b16 %v534, %v528
    %v679 = vpack.c.b16 %v535, %v529
    %v680 = vpack.c.b16 %v542, %v536
    %v681 = vpack.c.b16 %v543, %v537
    %v682 = vpack.c.b16 %v544, %v538
    %v683 = vpack.c.b16 %v545, %v539
    %v684 = vpack.c.b16 %v546, %v540
    %v685 = vpack.c.b16 %v547, %v541
    %v686 = vpack.c.b16 %v554, %v548
    %v687 = vpack.c.b16 %v555, %v549
    %v688 = vpack.c.b16 %v556, %v550
    %v689 = vpack.c.b16 %v557, %v551
    %v690 = vpack.c.b16 %v558, %v552
    %v691 = vpack.c.b16 %v559, %v553
    %v692 = vpack.c.b16 %v566, %v560
    %v693 = vpack.c.b16 %v567, %v561
    %v694 = vpack.c.b16 %v568, %v562
    %v695 = vpack.c.b16 %v569, %v563
    %v696 = vpack.c.b16 %v570, %v564
    %v697 = vpack.c.b16 %v571, %v565
    %v698 = vpack.c.b16 %v578, %v572
    %v699 = vpack.c.b16 %v579, %v573
    %v700 = vpack.c.b16 %v580, %v574
    %v701 = vpack.c.b16 %v581, %v575
    %v702 = vpack.c.b16 %v582, %v576
    %v703 = vpack.c.b16 %v583, %v577
    %v704 = vpack.c.b16 %v584, %v584
    %v705 = vpack.c.b16 %v585, %v585
    %v706 = vpack.c.b16 %v586, %v586
    %v707 = vpack.c.b16 %v587, %v587
    %v708 = vpack.c.b16 %v588, %v588
    %v709 = vpack.c.b16 %v589, %v589
    %vm824 = vcmask 457728
    %v826 = vsel %vm824, %v88, 0
    %vm828 = vcmask 1043456
    %v830 = vsel %vm828, %v704, 0
    %v833 = vsel %vm828, %v705, 0
    %v836 = vsel %vm828, %v706, 0
    %v839 = vsel %vm828, %v707, 0
    %v842 = vsel %vm828, %v708, 0
    %v845 = vsel %vm828, %v709, 0
    %847 = vmatprep.subr.bf16.mxu0 %v591
    %848 = vmatpush1.bf16.msra.mxu0 %v590
    %849 = vmatprep.subr.bf16.mxu0 %v597
    %850 = vmatpush1.bf16.msra.mxu0 %v596
    %851 = vmatprep.subr.bf16.mxu0 %v603
    %852 = vmatpush1.bf16.msra.mxu0 %v602
    %853 = vmatprep.subr.bf16.mxu0 %v609
    %854 = vmatpush1.bf16.msra.mxu0 %v608
    %855 = vmatprep.subr.bf16.mxu0 %v615
    %856 = vmatpush1.bf16.msra.mxu0 %v614
    %857 = vmatprep.subr.bf16.mxu0 %v621
    %858 = vmatpush1.bf16.msra.mxu0 %v620
    %859 = vmatprep.subr.bf16.mxu0 %v627
    %860 = vmatpush1.bf16.msra.mxu0 %v626
    %861 = vmatprep.subr.bf16.mxu0 %v633
    %862 = vmatpush1.bf16.msra.mxu0 %v632
    %863 = vmatprep.subr.bf16.mxu0 %v639
    %864 = vmatpush1.bf16.msra.mxu0 %v638
    %865 = vmatprep.subr.bf16.mxu0 %v645
    %866 = vmatpush1.bf16.msra.mxu0 %v644
    %867 = vmatprep.subr.bf16.mxu0 %v651
    %868 = vmatpush1.bf16.msra.mxu0 %v650
    %869 = vmatprep.subr.bf16.mxu0 %v657
    %870 = vmatpush1.bf16.msra.mxu0 %v656
    %871 = vmatprep.subr.bf16.mxu0 %v663
    %872 = vmatpush1.bf16.msra.mxu0 %v662
    %873 = vmatprep.subr.bf16.mxu0 %v669
    %874 = vmatpush1.bf16.msra.mxu0 %v668
    %875 = vmatprep.subr.bf16.mxu0 %v675
    %876 = vmatpush1.bf16.msra.mxu0 %v674
    %877 = vmatprep.subr.bf16.mxu0 %v681
    %878 = vmatpush1.bf16.msra.mxu0 %v680
    %879 = vmatprep.mubr.bf16.mxu0 %v87
    %880 = vmatmul.mubr.bf16.gmra.mrb[0].mxu0 %v86
    %v881 = vpop.f32.mrb[0].mxu0
    %v882 = vadd.f32 %v212, %v881
    %v883 = vpop.f32.mrb[0].mxu0
    %v884 = vadd.f32 %v216, %v883
    %v885 = vpop.f32.mrb[0].mxu0
    %v886 = vadd.f32 %v212, %v885
    %v887 = vpop.f32.mrb[0].mxu0
    %v888 = vadd.f32 %v216, %v887
    %889 = vdwg.mxu0
    %890 = vmatprep.subr.bf16.mxu0 %v687
    %891 = vmatpush1.bf16.msra.mxu0 %v686
    %892 = vmatprep.subr.bf16.mxu0 %v693
    %893 = vmatpush1.bf16.msra.mxu0 %v692
    %894 = vmatprep.subr.bf16.mxu0 %v699
    %895 = vmatpush1.bf16.msra.mxu0 %v698
    %896 = vmatprep.subr.bf16.mxu0 %v833
    %897 = vmatpush1.bf16.msra.mxu0 %v830
    %898 = vmatprep.subr.bf16.mxu0 0
    %899 = vmatpush1.bf16.msra.mxu0 0
    %900 = vmatprep.subr.bf16.mxu0 0
    %901 = vmatpush1.bf16.msra.mxu0 0
    %902 = vmatprep.subr.bf16.mxu0 0
    %903 = vmatpush1.bf16.msra.mxu0 0
    %904 = vmatprep.subr.bf16.mxu0 0
    %905 = vmatpush1.bf16.msra.mxu0 0
    %906 = vmatprep.subr.bf16.mxu0 0
    %907 = vmatpush1.bf16.msra.mxu0 0
    %908 = vmatprep.subr.bf16.mxu0 0
    %909 = vmatpush1.bf16.msra.mxu0 0
    %910 = vmatprep.subr.bf16.mxu0 0
    %911 = vmatpush1.bf16.msra.mxu0 0
    %912 = vmatprep.subr.bf16.mxu0 0
    %913 = vmatpush1.bf16.msra.mxu0 0
    %914 = vmatprep.subr.bf16.mxu0 0
    %915 = vmatpush1.bf16.msra.mxu0 0
    %916 = vmatprep.subr.bf16.mxu0 0
    %917 = vmatpush1.bf16.msra.mxu0 0
    %918 = vmatprep.subr.bf16.mxu0 0
    %919 = vmatpush1.bf16.msra.mxu0 0
    %920 = vmatprep.subr.bf16.mxu0 0
    %921 = vmatpush1.bf16.msra.mxu0 0
    %922 = vmatprep.mubr.bf16.mxu0 0
    %923 = vmatmul.mubr.bf16.gmra.mrb[0].mxu0 %v826
    %v924 = vpop.f32.mrb[0].mxu0
    %v925 = vadd.f32 %v882, %v924
    %v926 = vpop.f32.mrb[0].mxu0
    %v927 = vadd.f32 %v884, %v926
    %v928 = vpop.f32.mrb[0].mxu0
    %v929 = vadd.f32 %v886, %v928
    %v930 = vpop.f32.mrb[0].mxu0
    %v931 = vadd.f32 %v888, %v930
    %932 = vdwg.mxu0
    %933 = vmatprep.subr.bf16.mxu0 %v593
    %934 = vmatpush1.bf16.msra.mxu0 %v592
    %935 = vmatprep.subr.bf16.mxu0 %v599
    %936 = vmatpush1.bf16.msra.mxu0 %v598
    %937 = vmatprep.subr.bf16.mxu0 %v605
    %938 = vmatpush1.bf16.msra.mxu0 %v604
    %939 = vmatprep.subr.bf16.mxu0 %v611
    %940 = vmatpush1.bf16.msra.mxu0 %v610
    %941 = vmatprep.subr.bf16.mxu0 %v617
    %942 = vmatpush1.bf16.msra.mxu0 %v616
    %943 = vmatprep.subr.bf16.mxu0 %v623
    %944 = vmatpush1.bf16.msra.mxu0 %v622
    %945 = vmatprep.subr.bf16.mxu0 %v629
    %946 = vmatpush1.bf16.msra.mxu0 %v628
    %947 = vmatprep.subr.bf16.mxu0 %v635
    %948 = vmatpush1.bf16.msra.mxu0 %v634
    %949 = vmatprep.subr.bf16.mxu0 %v641
    %950 = vmatpush1.bf16.msra.mxu0 %v640
    %951 = vmatprep.subr.bf16.mxu0 %v647
    %952 = vmatpush1.bf16.msra.mxu0 %v646
    %953 = vmatprep.subr.bf16.mxu0 %v653
    %954 = vmatpush1.bf16.msra.mxu0 %v652
    %955 = vmatprep.subr.bf16.mxu0 %v659
    %956 = vmatpush1.bf16.msra.mxu0 %v658
    %957 = vmatprep.subr.bf16.mxu0 %v665
    %958 = vmatpush1.bf16.msra.mxu0 %v664
    %959 = vmatprep.subr.bf16.mxu0 %v671
    %960 = vmatpush1.bf16.msra.mxu0 %v670
    %961 = vmatprep.subr.bf16.mxu0 %v677
    %962 = vmatpush1.bf16.msra.mxu0 %v676
    %963 = vmatprep.subr.bf16.mxu0 %v683
    %964 = vmatpush1.bf16.msra.mxu0 %v682
    %965 = vmatprep.mubr.bf16.mxu0 %v87
    %966 = vmatmul.mubr.bf16.gmra.mrb[0].mxu0 %v86
    %v967 = vpop.f32.mrb[0].mxu0
    %v968 = vadd.f32 %v220, %v967
    %v969 = vpop.f32.mrb[0].mxu0
    %v970 = vadd.f32 %v224, %v969
    %v971 = vpop.f32.mrb[0].mxu0
    %v972 = vadd.f32 %v220, %v971
    %v973 = vpop.f32.mrb[0].mxu0
    %v974 = vadd.f32 %v224, %v973
    %975 = vdwg.mxu0
    %976 = vmatprep.subr.bf16.mxu0 %v689
    %977 = vmatpush1.bf16.msra.mxu0 %v688
    %978 = vmatprep.subr.bf16.mxu0 %v695
    %979 = vmatpush1.bf16.msra.mxu0 %v694
    %980 = vmatprep.subr.bf16.mxu0 %v701
    %981 = vmatpush1.bf16.msra.mxu0 %v700
    %982 = vmatprep.subr.bf16.mxu0 %v839
    %983 = vmatpush1.bf16.msra.mxu0 %v836
    %984 = vmatprep.subr.bf16.mxu0 0
    %985 = vmatpush1.bf16.msra.mxu0 0
    %986 = vmatprep.subr.bf16.mxu0 0
    %987 = vmatpush1.bf16.msra.mxu0 0
    %988 = vmatprep.subr.bf16.mxu0 0
    %989 = vmatpush1.bf16.msra.mxu0 0
    %990 = vmatprep.subr.bf16.mxu0 0
    %991 = vmatpush1.bf16.msra.mxu0 0
    %992 = vmatprep.subr.bf16.mxu0 0
    %993 = vmatpush1.bf16.msra.mxu0 0
    %994 = vmatprep.subr.bf16.mxu0 0
    %995 = vmatpush1.bf16.msra.mxu0 0
    %996 = vmatprep.subr.bf16.mxu0 0
    %997 = vmatpush1.bf16.msra.mxu0 0
    %998 = vmatprep.subr.bf16.mxu0 0
    %999 = vmatpush1.bf16.msra.mxu0 0
    %1000 = vmatprep.subr.bf16.mxu0 0
    %1001 = vmatpush1.bf16.msra.mxu0 0
    %1002 = vmatprep.subr.bf16.mxu0 0
    %1003 = vmatpush1.bf16.msra.mxu0 0
    %1004 = vmatprep.subr.bf16.mxu0 0
    %1005 = vmatpush1.bf16.msra.mxu0 0
    %1006 = vmatprep.subr.bf16.mxu0 0
    %1007 = vmatpush1.bf16.msra.mxu0 0
    %1008 = vmatprep.mubr.bf16.mxu0 0
    %1009 = vmatmul.mubr.bf16.gmra.mrb[0].mxu0 %v826
    %v1010 = vpop.f32.mrb[0].mxu0
    %v1011 = vadd.f32 %v968, %v1010
    %v1012 = vpop.f32.mrb[0].mxu0
    %v1013 = vadd.f32 %v970, %v1012
    %v1014 = vpop.f32.mrb[0].mxu0
    %v1015 = vadd.f32 %v972, %v1014
    %v1016 = vpop.f32.mrb[0].mxu0
    %v1017 = vadd.f32 %v974, %v1016
    %1018 = vdwg.mxu0
    %1019 = vmatprep.subr.bf16.mxu0 %v595
    %1020 = vmatpush1.bf16.msra.mxu0 %v594
    %1021 = vmatprep.subr.bf16.mxu0 %v601
    %1022 = vmatpush1.bf16.msra.mxu0 %v600
    %1023 = vmatprep.subr.bf16.mxu0 %v607
    %1024 = vmatpush1.bf16.msra.mxu0 %v606
    %1025 = vmatprep.subr.bf16.mxu0 %v613
    %1026 = vmatpush1.bf16.msra.mxu0 %v612
    %1027 = vmatprep.subr.bf16.mxu0 %v619
    %1028 = vmatpush1.bf16.msra.mxu0 %v618
    %1029 = vmatprep.subr.bf16.mxu0 %v625
    %1030 = vmatpush1.bf16.msra.mxu0 %v624
    %1031 = vmatprep.subr.bf16.mxu0 %v631
    %1032 = vmatpush1.bf16.msra.mxu0 %v630
    %1033 = vmatprep.subr.bf16.mxu0 %v637
    %1034 = vmatpush1.bf16.msra.mxu0 %v636
    %1035 = vmatprep.subr.bf16.mxu0 %v643
    %1036 = vmatpush1.bf16.msra.mxu0 %v642
    %1037 = vmatprep.subr.bf16.mxu0 %v649
    %1038 = vmatpush1.bf16.msra.mxu0 %v648
    %1039 = vmatprep.subr.bf16.mxu0 %v655
    %1040 = vmatpush1.bf16.msra.mxu0 %v654
    %1041 = vmatprep.subr.bf16.mxu0 %v661
    %1042 = vmatpush1.bf16.msra.mxu0 %v660
    %1043 = vmatprep.subr.bf16.mxu0 %v667
    %1044 = vmatpush1.bf16.msra.mxu0 %v666
    %1045 = vmatprep.subr.bf16.mxu0 %v673
    %1046 = vmatpush1.bf16.msra.mxu0 %v672
    %1047 = vmatprep.subr.bf16.mxu0 %v679
    %1048 = vmatpush1.bf16.msra.mxu0 %v678
    %1049 = vmatprep.subr.bf16.mxu0 %v685
    %1050 = vmatpush1.bf16.msra.mxu0 %v684
    %1051 = vmatprep.mubr.bf16.mxu0 %v87
    %1052 = vmatmul.mubr.bf16.gmra.mrb[0].mxu0 %v86
    %v1053 = vpop.f32.mrb[0].mxu0
    %v1054 = vadd.f32 %v228, %v1053
    %v1055 = vpop.f32.mrb[0].mxu0
    %v1056 = vadd.f32 %v232, %v1055
    %v1057 = vpop.f32.mrb[0].mxu0
    %v1058 = vadd.f32 %v228, %v1057
    %v1059 = vpop.f32.mrb[0].mxu0
    %v1060 = vadd.f32 %v232, %v1059
    %1061 = vdwg.mxu0
    %1062 = vmatprep.subr.bf16.mxu0 %v691
    %1063 = vmatpush1.bf16.msra.mxu0 %v690
    %1064 = vmatprep.subr.bf16.mxu0 %v697
    %1065 = vmatpush1.bf16.msra.mxu0 %v696
    %1066 = vmatprep.subr.bf16.mxu0 %v703
    %1067 = vmatpush1.bf16.msra.mxu0 %v702
    %1068 = vmatprep.subr.bf16.mxu0 %v845
    %1069 = vmatpush1.bf16.msra.mxu0 %v842
    %1070 = vmatprep.subr.bf16.mxu0 0
    %1071 = vmatpush1.bf16.msra.mxu0 0
    %1072 = vmatprep.subr.bf16.mxu0 0
    %1073 = vmatpush1.bf16.msra.mxu0 0
    %1074 = vmatprep.subr.bf16.mxu0 0
    %1075 = vmatpush1.bf16.msra.mxu0 0
    %1076 = vmatprep.subr.bf16.mxu0 0
    %1077 = vmatpush1.bf16.msra.mxu0 0
    %1078 = vmatprep.subr.bf16.mxu0 0
    %1079 = vmatpush1.bf16.msra.mxu0 0
    %1080 = vmatprep.subr.bf16.mxu0 0
    %1081 = vmatpush1.bf16.msra.mxu0 0
    %1082 = vmatprep.subr.bf16.mxu0 0
    %1083 = vmatpush1.bf16.msra.mxu0 0
    %1084 = vmatprep.subr.bf16.mxu0 0
    %1085 = vmatpush1.bf16.msra.mxu0 0
    %1086 = vmatprep.subr.bf16.mxu0 0
    %1087 = vmatpush1.bf16.msra.mxu0 0
    %1088 = vmatprep.subr.bf16.mxu0 0
    %1089 = vmatpush1.bf16.msra.mxu0 0
    %1090 = vmatprep.subr.bf16.mxu0 0
    %1091 = vmatpush1.bf16.msra.mxu0 0
    %1092 = vmatprep.subr.bf16.mxu0 0
    %1093 = vmatpush1.bf16.msra.mxu0 0
    %1094 = vmatprep.mubr.bf16.mxu0 0
    %1095 = vmatmul.mubr.bf16.gmra.mrb[0].mxu0 %v826
    %v1096 = vpop.f32.mrb[0].mxu0
    %v1097 = vadd.f32 %v1054, %v1096
    %v1098 = vpop.f32.mrb[0].mxu0
    %v1099 = vadd.f32 %v1056, %v1098
    %v1100 = vpop.f32.mrb[0].mxu0
    %v1101 = vadd.f32 %v1058, %v1100
    %v1102 = vpop.f32.mrb[0].mxu0
    %v1103 = vadd.f32 %v1060, %v1102
    %1104 = vdwg.mxu0
    %v1105 = vmul.f32 %v925, 0.01
    %v1106 = vmul.f32 %v927, 0.01
    %v1107 = vmul.f32 %v1011, 0.01
    %v1108 = vmul.f32 %v1013, 0.01
    %v1109 = vmul.f32 %v1097, 0.01
    %v1110 = vmul.f32 %v1099, 0.01
    %v1111 = vmul.f32 %v929, 0.01
    %v1112 = vmul.f32 %v931, 0.01
    %v1113 = vmul.f32 %v1015, 0.01
    %v1114 = vmul.f32 %v1017, 0.01
    %v1115 = vmul.f32 %v1101, 0.01
    %v1116 = vmul.f32 %v1103, 0.01
    %v1117 = vmax.f32 %v925, %v1105
    %v1118 = vmax.f32 %v927, %v1106
    %v1119 = vmax.f32 %v1011, %v1107
    %v1120 = vmax.f32 %v1013, %v1108
    %v1121 = vmax.f32 %v1097, %v1109
    %v1122 = vmax.f32 %v1099, %v1110
    %v1123 = vmax.f32 %v929, %v1111
    %v1124 = vmax.f32 %v931, %v1112
    %v1125 = vmax.f32 %v1015, %v1113
    %v1126 = vmax.f32 %v1017, %v1114
    %v1127 = vmax.f32 %v1101, %v1115
    %v1128 = vmax.f32 %v1103, %v1116
    %v1129 = vpack.c.bf16 %v1123, %v1117
    %v1130 = vpack.c.bf16 %v1124, %v1118
    %v1131 = vpack.c.bf16 %v1125, %v1119
    %v1132 = vpack.c.bf16 %v1126, %v1120
    %v1133 = vpack.c.bf16 %v1127, %v1121
    %v1134 = vpack.c.bf16 %v1128, %v1122
    %v1135 = vld [vmem:[#allocation7] sm:$0xf]
    %v1136 = vld [vmem:[#allocation7 + $0x4] sm:$0xf]
    %v1137 = vld [vmem:[#allocation7 + $0x8] sm:$0xf]
    %v1138 = vld [vmem:[#allocation7 + $0xc] sm:$0xf]
    %v1139 = vld [vmem:[#allocation7 + $0x10] sm:$0xf]
    %v1140 = vld [vmem:[#allocation7 + $0x14] sm:$0xf]
    %v1141 = vld [vmem:[#allocation7 + $0x18] sm:$0xf]
    %v1142 = vld [vmem:[#allocation7 + $0x1c] sm:$0xf]
    %v1143 = vld [vmem:[#allocation7 + $0x20] sm:$0xf]
    %v1144 = vld [vmem:[#allocation7 + $0x24] sm:$0xf]
    %v1145 = vld [vmem:[#allocation7 + $0x28] sm:$0xf]
    %v1146 = vld [vmem:[#allocation7 + $0x2c] sm:$0xf]
    %v1147 = vld [vmem:[#allocation7 + $0x30] sm:$0xf]
    %v1148 = vld [vmem:[#allocation7 + $0x34] sm:$0xf]
    %v1149 = vld [vmem:[#allocation7 + $0x38] sm:$0xf]
    %v1150 = vld [vmem:[#allocation7 + $0x3c] sm:$0xf]
    %v1151 = vld [vmem:[#allocation7 + $0x40] sm:$0xf]
    %v1152 = vld [vmem:[#allocation7 + $0x44] sm:$0xf]
    %v1153 = vld [vmem:[#allocation7 + $0x48] sm:$0xf]
    %v1154 = vld [vmem:[#allocation7 + $0x4c] sm:$0xf]
    %v1155 = vld [vmem:[#allocation7 + $0x50] sm:$0xf]
    %v1156 = vld [vmem:[#allocation7 + $0x54] sm:$0xf]
    %v1157 = vld [vmem:[#allocation7 + $0x58] sm:$0xf]
    %v1158 = vld [vmem:[#allocation7 + $0x5c] sm:$0xf]
    %v1159 = vld [vmem:[#allocation7 + $0x60] sm:$0xf]
    %v1160 = vld [vmem:[#allocation7 + $0x64] sm:$0xf]
    %v1161 = vld [vmem:[#allocation7 + $0x68] sm:$0xf]
    %v1162 = vld [vmem:[#allocation7 + $0x6c] sm:$0xf]
    %v1163 = vld [vmem:[#allocation7 + $0x70] sm:$0xf]
    %v1164 = vld [vmem:[#allocation7 + $0x74] sm:$0xf]
    %v1165 = vld [vmem:[#allocation7 + $0x78] sm:$0xf]
    %v1166 = vld [vmem:[#allocation7 + $0x7c] sm:$0xf]
    %v1167 = vld [vmem:[#allocation7 + $0x80] sm:$0xf]
    %v1168 = vld [vmem:[#allocation7 + $0x84] sm:$0xf]
    %v1169 = vld [vmem:[#allocation7 + $0x88] sm:$0xf]
    %v1170 = vld [vmem:[#allocation7 + $0x8c] sm:$0xf]
    %v1171 = vld [vmem:[#allocation7 + $0x90] sm:$0xf]
    %v1172 = vld [vmem:[#allocation7 + $0x94] sm:$0xf]
    %v1173 = vld [vmem:[#allocation7 + $0x98] sm:$0xf]
    %v1174 = vld [vmem:[#allocation7 + $0x9c] sm:$0xf]
    %v1175 = vld [vmem:[#allocation7 + $0xa0] sm:$0xf]
    %v1176 = vld [vmem:[#allocation7 + $0xa4] sm:$0xf]
    %v1177 = vld [vmem:[#allocation7 + $0xa8] sm:$0xf]
    %v1178 = vld [vmem:[#allocation7 + $0xac] sm:$0xf]
    %v1179 = vld [vmem:[#allocation7 + $0xb0] sm:$0xf]
    %v1180 = vld [vmem:[#allocation7 + $0xb4] sm:$0xf]
    %v1181 = vld [vmem:[#allocation7 + $0xb8] sm:$0xf]
    %v1182 = vld [vmem:[#allocation7 + $0xbc] sm:$0xf]
    %v1183 = vld [vmem:[#allocation7 + $0xc0] sm:$0xf]
    %v1184 = vld [vmem:[#allocation7 + $0xc4] sm:$0xf]
    %v1185 = vld [vmem:[#allocation7 + $0xc8] sm:$0xf]
    %v1186 = vld [vmem:[#allocation7 + $0xcc] sm:$0xf]
    %v1187 = vld [vmem:[#allocation7 + $0xd0] sm:$0xf]
    %v1188 = vld [vmem:[#allocation7 + $0xd4] sm:$0xf]
    %v1189 = vld [vmem:[#allocation7 + $0xd8] sm:$0xf]
    %v1190 = vld [vmem:[#allocation7 + $0xdc] sm:$0xf]
    %v1191 = vld [vmem:[#allocation7 + $0xe0] sm:$0xf]
    %v1192 = vld [vmem:[#allocation7 + $0xe4] sm:$0xf]
    %v1193 = vld [vmem:[#allocation7 + $0xe8] sm:$0xf]
    %v1194 = vld [vmem:[#allocation7 + $0xec] sm:$0xf]
    %v1195 = vld [vmem:[#allocation7 + $0xf0] sm:$0xf]
    %v1196 = vld [vmem:[#allocation7 + $0xf4] sm:$0xf]
    %v1197 = vld [vmem:[#allocation7 + $0xf8] sm:$0xf]
    %v1198 = vld [vmem:[#allocation7 + $0xfc] sm:$0xf]
    %v1199 = vld [vmem:[#allocation7 + $0x100] sm:$0xf]
    %v1200 = vld [vmem:[#allocation7 + $0x104] sm:$0xf]
    %v1201 = vld [vmem:[#allocation7 + $0x108] sm:$0xf]
    %v1202 = vld [vmem:[#allocation7 + $0x10c] sm:$0xf]
    %v1203 = vld [vmem:[#allocation7 + $0x110] sm:$0xf]
    %v1204 = vld [vmem:[#allocation7 + $0x114] sm:$0xf]
    %v1205 = vld [vmem:[#allocation7 + $0x118] sm:$0xf]
    %v1206 = vld [vmem:[#allocation7 + $0x11c] sm:$0xf]
    %v1207 = vld [vmem:[#allocation7 + $0x120] sm:$0xf]
    %v1208 = vld [vmem:[#allocation7 + $0x124] sm:$0xf]
    %v1209 = vld [vmem:[#allocation7 + $0x128] sm:$0xf]
    %v1210 = vld [vmem:[#allocation7 + $0x12c] sm:$0xf]
    %v1211 = vld [vmem:[#allocation7 + $0x130] sm:$0xf]
    %v1212 = vld [vmem:[#allocation7 + $0x134] sm:$0xf]
    %v1213 = vld [vmem:[#allocation7 + $0x138] sm:$0xf]
    %v1214 = vld [vmem:[#allocation7 + $0x13c] sm:$0xf]
    %v1215 = vld [vmem:[#allocation7 + $0x140] sm:$0xf]
    %v1216 = vld [vmem:[#allocation7 + $0x144] sm:$0xf]
    %v1217 = vld [vmem:[#allocation7 + $0x148] sm:$0xf]
    %v1218 = vld [vmem:[#allocation7 + $0x14c] sm:$0xf]
    %v1219 = vld [vmem:[#allocation7 + $0x150] sm:$0xf]
    %v1220 = vld [vmem:[#allocation7 + $0x154] sm:$0xf]
    %v1221 = vld [vmem:[#allocation7 + $0x158] sm:$0xf]
    %v1222 = vld [vmem:[#allocation7 + $0x15c] sm:$0xf]
    %v1223 = vld [vmem:[#allocation7 + $0x160] sm:$0xf]
    %v1224 = vld [vmem:[#allocation7 + $0x164] sm:$0xf]
    %v1225 = vld [vmem:[#allocation7 + $0x168] sm:$0xf]
    %v1226 = vld [vmem:[#allocation7 + $0x16c] sm:$0xf]
    %v1227 = vld [vmem:[#allocation7 + $0x170] sm:$0xf]
    %v1228 = vld [vmem:[#allocation7 + $0x174] sm:$0xf]
    %v1229 = vld [vmem:[#allocation7 + $0x178] sm:$0xf]
    %v1230 = vld [vmem:[#allocation7 + $0x17c] sm:$0xf]
    %v1231 = vlaneseq
    %v1232 = vshrl.u32 %v1231, 7
    %v1233 = vsub.s32 0, %v1232
    %v1234 = vrot.slane %v89, %v1233
    %v1331 = vunpack.c.l.b16 %v1135
    %v1332 = vunpack.c.l.b16 %v1136
    %v1333 = vunpack.c.l.b16 %v1137
    %v1334 = vunpack.c.l.b16 %v1138
    %v1335 = vunpack.c.l.b16 %v1139
    %v1336 = vunpack.c.l.b16 %v1140
    %v1337 = vunpack.c.l.b16 %v1141
    %v1338 = vunpack.c.l.b16 %v1142
    %v1339 = vunpack.c.l.b16 %v1143
    %v1340 = vunpack.c.l.b16 %v1144
    %v1341 = vunpack.c.l.b16 %v1145
    %v1342 = vunpack.c.l.b16 %v1146
    %v1343 = vunpack.c.l.b16 %v1147
    %v1344 = vunpack.c.l.b16 %v1148
    %v1345 = vunpack.c.l.b16 %v1149
    %v1346 = vunpack.c.l.b16 %v1150
    %v1347 = vunpack.c.l.b16 %v1151
    %v1348 = vunpack.c.l.b16 %v1152
    %v1349 = vunpack.c.l.b16 %v1153
    %v1350 = vunpack.c.l.b16 %v1154
    %v1351 = vunpack.c.l.b16 %v1155
    %v1352 = vunpack.c.l.b16 %v1156
    %v1353 = vunpack.c.l.b16 %v1157
    %v1354 = vunpack.c.l.b16 %v1158
    %v1355 = vunpack.c.l.b16 %v1159
    %v1356 = vunpack.c.l.b16 %v1160
    %v1357 = vunpack.c.l.b16 %v1161
    %v1358 = vunpack.c.l.b16 %v1162
    %v1359 = vunpack.c.l.b16 %v1163
    %v1360 = vunpack.c.l.b16 %v1164
    %v1361 = vunpack.c.l.b16 %v1165
    %v1362 = vunpack.c.l.b16 %v1166
    %v1363 = vunpack.c.l.b16 %v1167
    %v1364 = vunpack.c.l.b16 %v1168
    %v1365 = vunpack.c.l.b16 %v1169
    %v1366 = vunpack.c.l.b16 %v1170
    %v1367 = vunpack.c.l.b16 %v1171
    %v1368 = vunpack.c.l.b16 %v1172
    %v1369 = vunpack.c.l.b16 %v1173
    %v1370 = vunpack.c.l.b16 %v1174
    %v1371 = vunpack.c.l.b16 %v1175
    %v1372 = vunpack.c.l.b16 %v1176
    %v1373 = vunpack.c.l.b16 %v1177
    %v1374 = vunpack.c.l.b16 %v1178
    %v1375 = vunpack.c.l.b16 %v1179
    %v1376 = vunpack.c.l.b16 %v1180
    %v1377 = vunpack.c.l.b16 %v1181
    %v1378 = vunpack.c.l.b16 %v1182
    %v1379 = vunpack.c.l.b16 %v1183
    %v1380 = vunpack.c.l.b16 %v1184
    %v1381 = vunpack.c.l.b16 %v1185
    %v1382 = vunpack.c.l.b16 %v1186
    %v1383 = vunpack.c.l.b16 %v1187
    %v1384 = vunpack.c.l.b16 %v1188
    %v1385 = vunpack.c.l.b16 %v1189
    %v1386 = vunpack.c.l.b16 %v1190
    %v1387 = vunpack.c.l.b16 %v1191
    %v1388 = vunpack.c.l.b16 %v1192
    %v1389 = vunpack.c.l.b16 %v1193
    %v1390 = vunpack.c.l.b16 %v1194
    %v1391 = vunpack.c.l.b16 %v1195
    %v1392 = vunpack.c.l.b16 %v1196
    %v1393 = vunpack.c.l.b16 %v1197
    %v1394 = vunpack.c.l.b16 %v1198
    %v1395 = vunpack.c.l.b16 %v1199
    %v1396 = vunpack.c.l.b16 %v1200
    %v1397 = vunpack.c.l.b16 %v1201
    %v1398 = vunpack.c.l.b16 %v1202
    %v1399 = vunpack.c.l.b16 %v1203
    %v1400 = vunpack.c.l.b16 %v1204
    %v1401 = vunpack.c.l.b16 %v1205
    %v1402 = vunpack.c.l.b16 %v1206
    %v1403 = vunpack.c.l.b16 %v1207
    %v1404 = vunpack.c.l.b16 %v1208
    %v1405 = vunpack.c.l.b16 %v1209
    %v1406 = vunpack.c.l.b16 %v1210
    %v1407 = vunpack.c.l.b16 %v1211
    %v1408 = vunpack.c.l.b16 %v1212
    %v1409 = vunpack.c.l.b16 %v1213
    %v1410 = vunpack.c.l.b16 %v1214
    %v1411 = vunpack.c.l.b16 %v1215
    %v1412 = vunpack.c.l.b16 %v1216
    %v1413 = vunpack.c.l.b16 %v1217
    %v1414 = vunpack.c.l.b16 %v1218
    %v1415 = vunpack.c.l.b16 %v1219
    %v1416 = vunpack.c.l.b16 %v1220
    %v1417 = vunpack.c.l.b16 %v1221
    %v1418 = vunpack.c.l.b16 %v1222
    %v1419 = vunpack.c.l.b16 %v1223
    %v1420 = vunpack.c.l.b16 %v1224
    %v1421 = vunpack.c.l.b16 %v1225
    %v1422 = vunpack.c.l.b16 %v1226
    %v1423 = vunpack.c.l.b16 %v1227
    %v1424 = vunpack.c.l.b16 %v1228
    %v1425 = vunpack.c.l.b16 %v1229
    %v1426 = vunpack.c.l.b16 %v1230
    %v1427 = vpack.c.b16 %v1332, %v1331
    %v1428 = vpack.c.b16 %v1334, %v1333
    %v1429 = vpack.c.b16 %v1336, %v1335
    %v1430 = vpack.c.b16 %v1338, %v1337
    %v1431 = vpack.c.b16 %v1340, %v1339
    %v1432 = vpack.c.b16 %v1342, %v1341
    %v1433 = vpack.c.b16 %v1344, %v1343
    %v1434 = vpack.c.b16 %v1346, %v1345
    %v1435 = vpack.c.b16 %v1348, %v1347
    %v1436 = vpack.c.b16 %v1350, %v1349
    %v1437 = vpack.c.b16 %v1352, %v1351
    %v1438 = vpack.c.b16 %v1354, %v1353
    %v1439 = vpack.c.b16 %v1356, %v1355
    %v1440 = vpack.c.b16 %v1358, %v1357
    %v1441 = vpack.c.b16 %v1360, %v1359
    %v1442 = vpack.c.b16 %v1362, %v1361
    %v1443 = vpack.c.b16 %v1364, %v1363
    %v1444 = vpack.c.b16 %v1366, %v1365
    %v1445 = vpack.c.b16 %v1368, %v1367
    %v1446 = vpack.c.b16 %v1370, %v1369
    %v1447 = vpack.c.b16 %v1372, %v1371
    %v1448 = vpack.c.b16 %v1374, %v1373
    %v1449 = vpack.c.b16 %v1376, %v1375
    %v1450 = vpack.c.b16 %v1378, %v1377
    %v1451 = vpack.c.b16 %v1380, %v1379
    %v1452 = vpack.c.b16 %v1382, %v1381
    %v1453 = vpack.c.b16 %v1384, %v1383
    %v1454 = vpack.c.b16 %v1386, %v1385
    %v1455 = vpack.c.b16 %v1388, %v1387
    %v1456 = vpack.c.b16 %v1390, %v1389
    %v1457 = vpack.c.b16 %v1392, %v1391
    %v1458 = vpack.c.b16 %v1394, %v1393
    %v1459 = vpack.c.b16 %v1396, %v1395
    %v1460 = vpack.c.b16 %v1398, %v1397
    %v1461 = vpack.c.b16 %v1400, %v1399
    %v1462 = vpack.c.b16 %v1402, %v1401
    %v1463 = vpack.c.b16 %v1404, %v1403
    %v1464 = vpack.c.b16 %v1406, %v1405
    %v1465 = vpack.c.b16 %v1408, %v1407
    %v1466 = vpack.c.b16 %v1410, %v1409
    %v1467 = vpack.c.b16 %v1412, %v1411
    %v1468 = vpack.c.b16 %v1414, %v1413
    %v1469 = vpack.c.b16 %v1416, %v1415
    %v1470 = vpack.c.b16 %v1418, %v1417
    %v1471 = vpack.c.b16 %v1420, %v1419
    %v1472 = vpack.c.b16 %v1422, %v1421
    %v1473 = vpack.c.b16 %v1424, %v1423
    %v1474 = vpack.c.b16 %v1426, %v1425
    %1523 = vmatprep.subr.bf16.mxu0 0
    %1524 = vmatpush1.bf16.msra.mxu0 %v1427
    %1525 = vmatprep.subr.bf16.mxu0 0
    %1526 = vmatpush1.bf16.msra.mxu0 %v1428
    %1527 = vmatprep.subr.bf16.mxu0 0
    %1528 = vmatpush1.bf16.msra.mxu0 %v1429
    %1529 = vmatprep.subr.bf16.mxu0 0
    %1530 = vmatpush1.bf16.msra.mxu0 %v1430
    %1531 = vmatprep.subr.bf16.mxu0 0
    %1532 = vmatpush1.bf16.msra.mxu0 %v1431
    %1533 = vmatprep.subr.bf16.mxu0 0
    %1534 = vmatpush1.bf16.msra.mxu0 %v1432
    %1535 = vmatprep.subr.bf16.mxu0 0
    %1536 = vmatpush1.bf16.msra.mxu0 %v1433
    %1537 = vmatprep.subr.bf16.mxu0 0
    %1538 = vmatpush1.bf16.msra.mxu0 %v1434
    %1539 = vmatprep.subr.bf16.mxu0 0
    %1540 = vmatpush1.bf16.msra.mxu0 %v1435
    %1541 = vmatprep.subr.bf16.mxu0 0
    %1542 = vmatpush1.bf16.msra.mxu0 %v1436
    %1543 = vmatprep.subr.bf16.mxu0 0
    %1544 = vmatpush1.bf16.msra.mxu0 %v1437
    %1545 = vmatprep.subr.bf16.mxu0 0
    %1546 = vmatpush1.bf16.msra.mxu0 %v1438
    %1547 = vmatprep.subr.bf16.mxu0 0
    %1548 = vmatpush1.bf16.msra.mxu0 %v1439
    %1549 = vmatprep.subr.bf16.mxu0 0
    %1550 = vmatpush1.bf16.msra.mxu0 %v1440
    %1551 = vmatprep.subr.bf16.mxu0 0
    %1552 = vmatpush1.bf16.msra.mxu0 %v1441
    %1553 = vmatprep.subr.bf16.mxu0 0
    %1554 = vmatpush1.bf16.msra.mxu0 %v1442
    %1555 = vmatprep.mubr.bf16.mxu0 %v1130
    %1556 = vmatmul.mubr.bf16.gmra.mrb[0].mxu0 %v1129
    %v1557 = vpop.f32.mrb[0].mxu0
    %v1558 = vadd.f32 %v1234, %v1557
    %v1559 = vpop.f32.mrb[0].mxu0
    %v1560 = vpop.f32.mrb[0].mxu0
    %v1561 = vadd.f32 %v1234, %v1560
    %v1562 = vpop.f32.mrb[0].mxu0
    %1563 = vdwg.mxu0
    %1564 = vmatprep.subr.bf16.mxu0 0
    %1565 = vmatpush1.bf16.msra.mxu0 %v1443
    %1566 = vmatprep.subr.bf16.mxu0 0
    %1567 = vmatpush1.bf16.msra.mxu0 %v1444
    %1568 = vmatprep.subr.bf16.mxu0 0
    %1569 = vmatpush1.bf16.msra.mxu0 %v1445
    %1570 = vmatprep.subr.bf16.mxu0 0
    %1571 = vmatpush1.bf16.msra.mxu0 %v1446
    %1572 = vmatprep.subr.bf16.mxu0 0
    %1573 = vmatpush1.bf16.msra.mxu0 %v1447
    %1574 = vmatprep.subr.bf16.mxu0 0
    %1575 = vmatpush1.bf16.msra.mxu0 %v1448
    %1576 = vmatprep.subr.bf16.mxu0 0
    %1577 = vmatpush1.bf16.msra.mxu0 %v1449
    %1578 = vmatprep.subr.bf16.mxu0 0
    %1579 = vmatpush1.bf16.msra.mxu0 %v1450
    %1580 = vmatprep.subr.bf16.mxu0 0
    %1581 = vmatpush1.bf16.msra.mxu0 %v1451
    %1582 = vmatprep.subr.bf16.mxu0 0
    %1583 = vmatpush1.bf16.msra.mxu0 %v1452
    %1584 = vmatprep.subr.bf16.mxu0 0
    %1585 = vmatpush1.bf16.msra.mxu0 %v1453
    %1586 = vmatprep.subr.bf16.mxu0 0
    %1587 = vmatpush1.bf16.msra.mxu0 %v1454
    %1588 = vmatprep.subr.bf16.mxu0 0
    %1589 = vmatpush1.bf16.msra.mxu0 %v1455
    %1590 = vmatprep.subr.bf16.mxu0 0
    %1591 = vmatpush1.bf16.msra.mxu0 %v1456
    %1592 = vmatprep.subr.bf16.mxu0 0
    %1593 = vmatpush1.bf16.msra.mxu0 %v1457
    %1594 = vmatprep.subr.bf16.mxu0 0
    %1595 = vmatpush1.bf16.msra.mxu0 %v1458
    %1596 = vmatprep.mubr.bf16.mxu0 %v1132
    %1597 = vmatmul.mubr.bf16.gmra.mrb[0].mxu0 %v1131
    %v1598 = vpop.f32.mrb[0].mxu0
    %v1599 = vadd.f32 %v1558, %v1598
    %v1600 = vpop.f32.mrb[0].mxu0
    %v1601 = vpop.f32.mrb[0].mxu0
    %v1602 = vadd.f32 %v1561, %v1601
    %v1603 = vpop.f32.mrb[0].mxu0
    %1604 = vdwg.mxu0
    %1605 = vmatprep.subr.bf16.mxu0 0
    %1606 = vmatpush1.bf16.msra.mxu0 %v1459
    %1607 = vmatprep.subr.bf16.mxu0 0
    %1608 = vmatpush1.bf16.msra.mxu0 %v1460
    %1609 = vmatprep.subr.bf16.mxu0 0
    %1610 = vmatpush1.bf16.msra.mxu0 %v1461
    %1611 = vmatprep.subr.bf16.mxu0 0
    %1612 = vmatpush1.bf16.msra.mxu0 %v1462
    %1613 = vmatprep.subr.bf16.mxu0 0
    %1614 = vmatpush1.bf16.msra.mxu0 %v1463
    %1615 = vmatprep.subr.bf16.mxu0 0
    %1616 = vmatpush1.bf16.msra.mxu0 %v1464
    %1617 = vmatprep.subr.bf16.mxu0 0
    %1618 = vmatpush1.bf16.msra.mxu0 %v1465
    %1619 = vmatprep.subr.bf16.mxu0 0
    %1620 = vmatpush1.bf16.msra.mxu0 %v1466
    %1621 = vmatprep.subr.bf16.mxu0 0
    %1622 = vmatpush1.bf16.msra.mxu0 %v1467
    %1623 = vmatprep.subr.bf16.mxu0 0
    %1624 = vmatpush1.bf16.msra.mxu0 %v1468
    %1625 = vmatprep.subr.bf16.mxu0 0
    %1626 = vmatpush1.bf16.msra.mxu0 %v1469
    %1627 = vmatprep.subr.bf16.mxu0 0
    %1628 = vmatpush1.bf16.msra.mxu0 %v1470
    %1629 = vmatprep.subr.bf16.mxu0 0
    %1630 = vmatpush1.bf16.msra.mxu0 %v1471
    %1631 = vmatprep.subr.bf16.mxu0 0
    %1632 = vmatpush1.bf16.msra.mxu0 %v1472
    %1633 = vmatprep.subr.bf16.mxu0 0
    %1634 = vmatpush1.bf16.msra.mxu0 %v1473
    %1635 = vmatprep.subr.bf16.mxu0 0
    %1636 = vmatpush1.bf16.msra.mxu0 %v1474
    %1637 = vmatprep.mubr.bf16.mxu0 %v1134
    %1638 = vmatmul.mubr.bf16.gmra.mrb[0].mxu0 %v1133
    %v1639 = vpop.f32.mrb[0].mxu0
    %v1640 = vadd.f32 %v1599, %v1639
    %v1641 = vpop.f32.mrb[0].mxu0
    %v1642 = vpop.f32.mrb[0].mxu0
    %v1643 = vadd.f32 %v1602, %v1642
    %v1644 = vpop.f32.mrb[0].mxu0
    %1645 = vdwg.mxu0
    %v1646 = vmax.f32 %v1640, 0.0
    %v1647 = vmax.f32 %v1643, 0.0
    %v1648 = vpack.c.bf16 %v1647, %v1646
    %v1649 = vld [vmem:[#allocation8] sm:$0xf]
    %v1650 = vld [vmem:[#allocation8 + $0x4] sm:$0xf]
    %v1651 = vld [vmem:[#allocation8 + $0x8] sm:$0xf]
    %v1652 = vld [vmem:[#allocation8 + $0xc] sm:$0xf]
    %v1653 = vld [vmem:[#allocation8 + $0x10] sm:$0xf]
    %v1654 = vld [vmem:[#allocation8 + $0x14] sm:$0xf]
    %v1655 = vld [vmem:[#allocation8 + $0x18] sm:$0xf]
    %v1656 = vld [vmem:[#allocation8 + $0x1c] sm:$0xf]
    %v1657 = vld [vmem:[#allocation8 + $0x20] sm:$0xf]
    %v1658 = vld [vmem:[#allocation8 + $0x24] sm:$0xf]
    %v1659 = vld [vmem:[#allocation8 + $0x28] sm:$0xf]
    %v1660 = vld [vmem:[#allocation8 + $0x2c] sm:$0xf]
    %v1661 = vld [vmem:[#allocation8 + $0x30] sm:$0xf]
    %v1662 = vld [vmem:[#allocation8 + $0x34] sm:$0xf]
    %v1663 = vld [vmem:[#allocation8 + $0x38] sm:$0xf]
    %v1664 = vld [vmem:[#allocation8 + $0x3c] sm:$0xf]
    %v1665 = vlaneseq
    %v1666 = vshrl.u32 %v1665, 7
    %v1667 = vsub.s32 1, %v1666
    %v1668 = vrot.slane %v89, %v1667
    %v1685 = vunpack.c.l.b16 %v1649
    %v1686 = vunpack.c.l.b16 %v1650
    %v1687 = vunpack.c.l.b16 %v1651
    %v1688 = vunpack.c.l.b16 %v1652
    %v1689 = vunpack.c.l.b16 %v1653
    %v1690 = vunpack.c.l.b16 %v1654
    %v1691 = vunpack.c.l.b16 %v1655
    %v1692 = vunpack.c.l.b16 %v1656
    %v1693 = vunpack.c.l.b16 %v1657
    %v1694 = vunpack.c.l.b16 %v1658
    %v1695 = vunpack.c.l.b16 %v1659
    %v1696 = vunpack.c.l.b16 %v1660
    %v1697 = vunpack.c.l.b16 %v1661
    %v1698 = vunpack.c.l.b16 %v1662
    %v1699 = vunpack.c.l.b16 %v1663
    %v1700 = vunpack.c.l.b16 %v1664
    %v1701 = vpack.c.b16 %v1686, %v1685
    %v1702 = vpack.c.b16 %v1688, %v1687
    %v1703 = vpack.c.b16 %v1690, %v1689
    %v1704 = vpack.c.b16 %v1692, %v1691
    %v1705 = vpack.c.b16 %v1694, %v1693
    %v1706 = vpack.c.b16 %v1696, %v1695
    %v1707 = vpack.c.b16 %v1698, %v1697
    %v1708 = vpack.c.b16 %v1700, %v1699
    %1717 = vmatprep.subr.bf16.mxu0 0
    %1718 = vmatpush1.bf16.msra.mxu0 %v1701
    %1719 = vmatprep.subr.bf16.mxu0 0
    %1720 = vmatpush1.bf16.msra.mxu0 %v1702
    %1721 = vmatprep.subr.bf16.mxu0 0
    %1722 = vmatpush1.bf16.msra.mxu0 %v1703
    %1723 = vmatprep.subr.bf16.mxu0 0
    %1724 = vmatpush1.bf16.msra.mxu0 %v1704
    %1725 = vmatprep.subr.bf16.mxu0 0
    %1726 = vmatpush1.bf16.msra.mxu0 %v1705
    %1727 = vmatprep.subr.bf16.mxu0 0
    %1728 = vmatpush1.bf16.msra.mxu0 %v1706
    %1729 = vmatprep.subr.bf16.mxu0 0
    %1730 = vmatpush1.bf16.msra.mxu0 %v1707
    %1731 = vmatprep.subr.bf16.mxu0 0
    %1732 = vmatpush1.bf16.msra.mxu0 %v1708
    %1733 = vmatprep.subr.bf16.mxu0 0
    %1734 = vmatpush1.bf16.msra.mxu0 0
    %1735 = vmatprep.subr.bf16.mxu0 0
    %1736 = vmatpush1.bf16.msra.mxu0 0
    %1737 = vmatprep.subr.bf16.mxu0 0
    %1738 = vmatpush1.bf16.msra.mxu0 0
    %1739 = vmatprep.subr.bf16.mxu0 0
    %1740 = vmatpush1.bf16.msra.mxu0 0
    %1741 = vmatprep.subr.bf16.mxu0 0
    %1742 = vmatpush1.bf16.msra.mxu0 0
    %1743 = vmatprep.subr.bf16.mxu0 0
    %1744 = vmatpush1.bf16.msra.mxu0 0
    %1745 = vmatprep.subr.bf16.mxu0 0
    %1746 = vmatpush1.bf16.msra.mxu0 0
    %1747 = vmatprep.subr.bf16.mxu0 0
    %1748 = vmatpush1.bf16.msra.mxu0 0
    %1749 = vmatprep.mubr.bf16.mxu0 0
    %1750 = vmatmul.mubr.bf16.gmra.mrb[0].mxu0 %v1648
    %v1751 = vpop.f32.mrb[0].mxu0
    %v1752 = vadd.f32 %v1668, %v1751
    %v1753 = vpop.f32.mrb[0].mxu0
    %v1754 = vpop.f32.mrb[0].mxu0
    %v1755 = vadd.f32 %v1668, %v1754
    %v1756 = vpop.f32.mrb[0].mxu0
    %1757 = vdwg.mxu0
    %v1758 = vmax.f32 %v1752, 0.0
    %v1759 = vmax.f32 %v1755, 0.0
    %v1760 = vpack.c.bf16 %v1759, %v1758
    %s1761 = scalar_lea.vmem [#allocation8], 64
    %v1762 = vld [vmem:[%s1761] sm:$0xf]
    %v1763 = vld [vmem:[%s1761 + $0x4] sm:$0xf]
    %v1764 = vld [vmem:[%s1761 + $0x8] sm:$0xf]
    %v1765 = vld [vmem:[%s1761 + $0xc] sm:$0xf]
    %v1766 = vld [vmem:[%s1761 + $0x10] sm:$0xf]
    %v1767 = vld [vmem:[%s1761 + $0x14] sm:$0xf]
    %v1768 = vld [vmem:[%s1761 + $0x18] sm:$0xf]
    %v1769 = vld [vmem:[%s1761 + $0x1c] sm:$0xf]
    %v1770 = vld [vmem:[%s1761 + $0x20] sm:$0xf]
    %v1771 = vld [vmem:[%s1761 + $0x24] sm:$0xf]
    %v1772 = vld [vmem:[%s1761 + $0x28] sm:$0xf]
    %v1773 = vld [vmem:[%s1761 + $0x2c] sm:$0xf]
    %v1774 = vld [vmem:[%s1761 + $0x30] sm:$0xf]
    %v1775 = vld [vmem:[%s1761 + $0x34] sm:$0xf]
    %v1776 = vld [vmem:[%s1761 + $0x38] sm:$0xf]
    %v1777 = vld [vmem:[%s1761 + $0x3c] sm:$0xf]
    %v1778 = vlaneseq
    %v1779 = vshrl.u32 %v1778, 7
    %v1780 = vsub.s32 2, %v1779
    %v1781 = vrot.slane %v89, %v1780
    %v1798 = vunpack.c.l.b16 %v1762
    %v1799 = vunpack.c.l.b16 %v1763
    %v1800 = vunpack.c.l.b16 %v1764
    %v1801 = vunpack.c.l.b16 %v1765
    %v1802 = vunpack.c.l.b16 %v1766
    %v1803 = vunpack.c.l.b16 %v1767
    %v1804 = vunpack.c.l.b16 %v1768
    %v1805 = vunpack.c.l.b16 %v1769
    %v1806 = vunpack.c.l.b16 %v1770
    %v1807 = vunpack.c.l.b16 %v1771
    %v1808 = vunpack.c.l.b16 %v1772
    %v1809 = vunpack.c.l.b16 %v1773
    %v1810 = vunpack.c.l.b16 %v1774
    %v1811 = vunpack.c.l.b16 %v1775
    %v1812 = vunpack.c.l.b16 %v1776
    %v1813 = vunpack.c.l.b16 %v1777
    %v1814 = vpack.c.b16 %v1799, %v1798
    %v1815 = vpack.c.b16 %v1801, %v1800
    %v1816 = vpack.c.b16 %v1803, %v1802
    %v1817 = vpack.c.b16 %v1805, %v1804
    %v1818 = vpack.c.b16 %v1807, %v1806
    %v1819 = vpack.c.b16 %v1809, %v1808
    %v1820 = vpack.c.b16 %v1811, %v1810
    %v1821 = vpack.c.b16 %v1813, %v1812
    %1830 = vmatprep.subr.bf16.mxu0 0
    %1831 = vmatpush1.bf16.msra.mxu0 %v1814
    %1832 = vmatprep.subr.bf16.mxu0 0
    %1833 = vmatpush1.bf16.msra.mxu0 %v1815
    %1834 = vmatprep.subr.bf16.mxu0 0
    %1835 = vmatpush1.bf16.msra.mxu0 %v1816
    %1836 = vmatprep.subr.bf16.mxu0 0
    %1837 = vmatpush1.bf16.msra.mxu0 %v1817
    %1838 = vmatprep.subr.bf16.mxu0 0
    %1839 = vmatpush1.bf16.msra.mxu0 %v1818
    %1840 = vmatprep.subr.bf16.mxu0 0
    %1841 = vmatpush1.bf16.msra.mxu0 %v1819
    %1842 = vmatprep.subr.bf16.mxu0 0
    %1843 = vmatpush1.bf16.msra.mxu0 %v1820
    %1844 = vmatprep.subr.bf16.mxu0 0
    %1845 = vmatpush1.bf16.msra.mxu0 %v1821
    %1846 = vmatprep.subr.bf16.mxu0 0
    %1847 = vmatpush1.bf16.msra.mxu0 0
    %1848 = vmatprep.subr.bf16.mxu0 0
    %1849 = vmatpush1.bf16.msra.mxu0 0
    %1850 = vmatprep.subr.bf16.mxu0 0
    %1851 = vmatpush1.bf16.msra.mxu0 0
    %1852 = vmatprep.subr.bf16.mxu0 0
    %1853 = vmatpush1.bf16.msra.mxu0 0
    %1854 = vmatprep.subr.bf16.mxu0 0
    %1855 = vmatpush1.bf16.msra.mxu0 0
    %1856 = vmatprep.subr.bf16.mxu0 0
    %1857 = vmatpush1.bf16.msra.mxu0 0
    %1858 = vmatprep.subr.bf16.mxu0 0
    %1859 = vmatpush1.bf16.msra.mxu0 0
    %1860 = vmatprep.subr.bf16.mxu0 0
    %1861 = vmatpush1.bf16.msra.mxu0 0
    %1862 = vmatprep.mubr.bf16.mxu0 0
    %1863 = vmatmul.mubr.bf16.gmra.mrb[0].mxu0 %v1760
    %v1864 = vpop.f32.mrb[0].mxu0
    %v1865 = vadd.f32 %v1781, %v1864
    %v1866 = vpop.f32.mrb[0].mxu0
    %v1867 = vpop.f32.mrb[0].mxu0
    %v1868 = vadd.f32 %v1781, %v1867
    %v1869 = vpop.f32.mrb[0].mxu0
    %1870 = vdwg.mxu0
    %v1871 = vmax.f32 %v1865, 0.0
    %v1872 = vmax.f32 %v1868, 0.0
    %v1873 = vpack.c.bf16 %v1872, %v1871
    %s1874 = scalar_lea.vmem [#allocation8], 128
    %v1875 = vld [vmem:[%s1874] sm:$0xf]
    %v1876 = vld [vmem:[%s1874 + $0x4] sm:$0xf]
    %v1877 = vld [vmem:[%s1874 + $0x8] sm:$0xf]
    %v1878 = vld [vmem:[%s1874 + $0xc] sm:$0xf]
    %v1879 = vld [vmem:[%s1874 + $0x10] sm:$0xf]
    %v1880 = vld [vmem:[%s1874 + $0x14] sm:$0xf]
    %v1881 = vld [vmem:[%s1874 + $0x18] sm:$0xf]
    %v1882 = vld [vmem:[%s1874 + $0x1c] sm:$0xf]
    %v1883 = vld [vmem:[%s1874 + $0x20] sm:$0xf]
    %v1884 = vld [vmem:[%s1874 + $0x24] sm:$0xf]
    %v1885 = vld [vmem:[%s1874 + $0x28] sm:$0xf]
    %v1886 = vld [vmem:[%s1874 + $0x2c] sm:$0xf]
    %v1887 = vld [vmem:[%s1874 + $0x30] sm:$0xf]
    %v1888 = vld [vmem:[%s1874 + $0x34] sm:$0xf]
    %v1889 = vld [vmem:[%s1874 + $0x38] sm:$0xf]
    %v1890 = vld [vmem:[%s1874 + $0x3c] sm:$0xf]
    %v1891 = vlaneseq
    %v1892 = vshrl.u32 %v1891, 7
    %v1893 = vsub.s32 3, %v1892
    %v1894 = vrot.slane %v89, %v1893
    %v1911 = vunpack.c.l.b16 %v1875
    %v1912 = vunpack.c.l.b16 %v1876
    %v1913 = vunpack.c.l.b16 %v1877
    %v1914 = vunpack.c.l.b16 %v1878
    %v1915 = vunpack.c.l.b16 %v1879
    %v1916 = vunpack.c.l.b16 %v1880
    %v1917 = vunpack.c.l.b16 %v1881
    %v1918 = vunpack.c.l.b16 %v1882
    %v1919 = vunpack.c.l.b16 %v1883
    %v1920 = vunpack.c.l.b16 %v1884
    %v1921 = vunpack.c.l.b16 %v1885
    %v1922 = vunpack.c.l.b16 %v1886
    %v1923 = vunpack.c.l.b16 %v1887
    %v1924 = vunpack.c.l.b16 %v1888
    %v1925 = vunpack.c.l.b16 %v1889
    %v1926 = vunpack.c.l.b16 %v1890
    %v1927 = vpack.c.b16 %v1912, %v1911
    %v1928 = vpack.c.b16 %v1914, %v1913
    %v1929 = vpack.c.b16 %v1916, %v1915
    %v1930 = vpack.c.b16 %v1918, %v1917
    %v1931 = vpack.c.b16 %v1920, %v1919
    %v1932 = vpack.c.b16 %v1922, %v1921
    %v1933 = vpack.c.b16 %v1924, %v1923
    %v1934 = vpack.c.b16 %v1926, %v1925
    %1943 = vmatprep.subr.bf16.mxu0 0
    %1944 = vmatpush1.bf16.msra.mxu0 %v1927
    %1945 = vmatprep.subr.bf16.mxu0 0
    %1946 = vmatpush1.bf16.msra.mxu0 %v1928
    %1947 = vmatprep.subr.bf16.mxu0 0
    %1948 = vmatpush1.bf16.msra.mxu0 %v1929
    %1949 = vmatprep.subr.bf16.mxu0 0
    %1950 = vmatpush1.bf16.msra.mxu0 %v1930
    %1951 = vmatprep.subr.bf16.mxu0 0
    %1952 = vmatpush1.bf16.msra.mxu0 %v1931
    %1953 = vmatprep.subr.bf16.mxu0 0
    %1954 = vmatpush1.bf16.msra.mxu0 %v1932
    %1955 = vmatprep.subr.bf16.mxu0 0
    %1956 = vmatpush1.bf16.msra.mxu0 %v1933
    %1957 = vmatprep.subr.bf16.mxu0 0
    %1958 = vmatpush1.bf16.msra.mxu0 %v1934
    %1959 = vmatprep.subr.bf16.mxu0 0
    %1960 = vmatpush1.bf16.msra.mxu0 0
    %1961 = vmatprep.subr.bf16.mxu0 0
    %1962 = vmatpush1.bf16.msra.mxu0 0
    %1963 = vmatprep.subr.bf16.mxu0 0
    %1964 = vmatpush1.bf16.msra.mxu0 0
    %1965 = vmatprep.subr.bf16.mxu0 0
    %1966 = vmatpush1.bf16.msra.mxu0 0
    %1967 = vmatprep.subr.bf16.mxu0 0
    %1968 = vmatpush1.bf16.msra.mxu0 0
    %1969 = vmatprep.subr.bf16.mxu0 0
    %1970 = vmatpush1.bf16.msra.mxu0 0
    %1971 = vmatprep.subr.bf16.mxu0 0
    %1972 = vmatpush1.bf16.msra.mxu0 0
    %1973 = vmatprep.subr.bf16.mxu0 0
    %1974 = vmatpush1.bf16.msra.mxu0 0
    %1975 = vmatprep.mubr.bf16.mxu0 0
    %1976 = vmatmul.mubr.bf16.gmra.mrb[0].mxu0 %v1873
    %v1977 = vpop.f32.mrb[0].mxu0
    %v1978 = vadd.f32 %v1894, %v1977
    %v1979 = vpop.f32.mrb[0].mxu0
    %v1980 = vpop.f32.mrb[0].mxu0
    %v1981 = vadd.f32 %v1894, %v1980
    %v1982 = vpop.f32.mrb[0].mxu0
    %1983 = vdwg.mxu0
    %v1984 = vmax.f32 %v1978, 0.0
    %v1985 = vmax.f32 %v1981, 0.0
    %v1986 = vpack.c.bf16 %v1985, %v1984
    %s1987 = scalar_lea.vmem [#allocation8], 192
    %v1988 = vld [vmem:[%s1987] sm:$0xf]
    %v1989 = vld [vmem:[%s1987 + $0x4] sm:$0xf]
    %v1990 = vld [vmem:[%s1987 + $0x8] sm:$0xf]
    %v1991 = vld [vmem:[%s1987 + $0xc] sm:$0xf]
    %v1992 = vld [vmem:[%s1987 + $0x10] sm:$0xf]
    %v1993 = vld [vmem:[%s1987 + $0x14] sm:$0xf]
    %v1994 = vld [vmem:[%s1987 + $0x18] sm:$0xf]
    %v1995 = vld [vmem:[%s1987 + $0x1c] sm:$0xf]
    %v1996 = vld [vmem:[%s1987 + $0x20] sm:$0xf]
    %v1997 = vld [vmem:[%s1987 + $0x24] sm:$0xf]
    %v1998 = vld [vmem:[%s1987 + $0x28] sm:$0xf]
    %v1999 = vld [vmem:[%s1987 + $0x2c] sm:$0xf]
    %v2000 = vld [vmem:[%s1987 + $0x30] sm:$0xf]
    %v2001 = vld [vmem:[%s1987 + $0x34] sm:$0xf]
    %v2002 = vld [vmem:[%s1987 + $0x38] sm:$0xf]
    %v2003 = vld [vmem:[%s1987 + $0x3c] sm:$0xf]
    %v2004 = vlaneseq
    %v2005 = vshrl.u32 %v2004, 7
    %v2006 = vsub.s32 4, %v2005
    %v2007 = vrot.slane %v89, %v2006
    %v2024 = vunpack.c.l.b16 %v1988
    %v2025 = vunpack.c.l.b16 %v1989
    %v2026 = vunpack.c.l.b16 %v1990
    %v2027 = vunpack.c.l.b16 %v1991
    %v2028 = vunpack.c.l.b16 %v1992
    %v2029 = vunpack.c.l.b16 %v1993
    %v2030 = vunpack.c.l.b16 %v1994
    %v2031 = vunpack.c.l.b16 %v1995
    %v2032 = vunpack.c.l.b16 %v1996
    %v2033 = vunpack.c.l.b16 %v1997
    %v2034 = vunpack.c.l.b16 %v1998
    %v2035 = vunpack.c.l.b16 %v1999
    %v2036 = vunpack.c.l.b16 %v2000
    %v2037 = vunpack.c.l.b16 %v2001
    %v2038 = vunpack.c.l.b16 %v2002
    %v2039 = vunpack.c.l.b16 %v2003
    %v2040 = vpack.c.b16 %v2025, %v2024
    %v2041 = vpack.c.b16 %v2027, %v2026
    %v2042 = vpack.c.b16 %v2029, %v2028
    %v2043 = vpack.c.b16 %v2031, %v2030
    %v2044 = vpack.c.b16 %v2033, %v2032
    %v2045 = vpack.c.b16 %v2035, %v2034
    %v2046 = vpack.c.b16 %v2037, %v2036
    %v2047 = vpack.c.b16 %v2039, %v2038
    %2056 = vmatprep.subr.bf16.mxu0 0
    %2057 = vmatpush1.bf16.msra.mxu0 %v2040
    %2058 = vmatprep.subr.bf16.mxu0 0
    %2059 = vmatpush1.bf16.msra.mxu0 %v2041
    %2060 = vmatprep.subr.bf16.mxu0 0
    %2061 = vmatpush1.bf16.msra.mxu0 %v2042
    %2062 = vmatprep.subr.bf16.mxu0 0
    %2063 = vmatpush1.bf16.msra.mxu0 %v2043
    %2064 = vmatprep.subr.bf16.mxu0 0
    %2065 = vmatpush1.bf16.msra.mxu0 %v2044
    %2066 = vmatprep.subr.bf16.mxu0 0
    %2067 = vmatpush1.bf16.msra.mxu0 %v2045
    %2068 = vmatprep.subr.bf16.mxu0 0
    %2069 = vmatpush1.bf16.msra.mxu0 %v2046
    %2070 = vmatprep.subr.bf16.mxu0 0
    %2071 = vmatpush1.bf16.msra.mxu0 %v2047
    %2072 = vmatprep.subr.bf16.mxu0 0
    %2073 = vmatpush1.bf16.msra.mxu0 0
    %2074 = vmatprep.subr.bf16.mxu0 0
    %2075 = vmatpush1.bf16.msra.mxu0 0
    %2076 = vmatprep.subr.bf16.mxu0 0
    %2077 = vmatpush1.bf16.msra.mxu0 0
    %2078 = vmatprep.subr.bf16.mxu0 0
    %2079 = vmatpush1.bf16.msra.mxu0 0
    %2080 = vmatprep.subr.bf16.mxu0 0
    %2081 = vmatpush1.bf16.msra.mxu0 0
    %2082 = vmatprep.subr.bf16.mxu0 0
    %2083 = vmatpush1.bf16.msra.mxu0 0
    %2084 = vmatprep.subr.bf16.mxu0 0
    %2085 = vmatpush1.bf16.msra.mxu0 0
    %2086 = vmatprep.subr.bf16.mxu0 0
    %2087 = vmatpush1.bf16.msra.mxu0 0
    %2088 = vmatprep.mubr.bf16.mxu0 0
    %2089 = vmatmul.mubr.bf16.gmra.mrb[0].mxu0 %v1986
    %v2090 = vpop.f32.mrb[0].mxu0
    %v2091 = vadd.f32 %v2007, %v2090
    %v2092 = vpop.f32.mrb[0].mxu0
    %v2093 = vpop.f32.mrb[0].mxu0
    %v2094 = vadd.f32 %v2007, %v2093
    %v2095 = vpop.f32.mrb[0].mxu0
    %2096 = vdwg.mxu0
    %v2097 = vpack.c.bf16 %v2094, %v2091
    %v2099 = vunpack.c.l.b16 %v2097
    %v2100 = vunpack.c.h.b16 %v2097
    %v2101 = vpack.c.b16 %v2099, %v2099
    %v2102 = vpack.c.b16 %v2100, %v2100
    %2105 = vst [vmem:[#allocation10] sm:$0xf] %v2101
    %2106 = vst [vmem:[#allocation10 + $0x4] sm:$0xf] %v2102
    // Predicated region
    $region42: #{_forward_padded.1} parent=1 // pred_check
      _
    $region43: #{_forward_padded.1} parent=1 // pred_check_branch
      %2108 = sbr.rel (0) target = $region45
    $region44: #{_forward_padded.1} parent=1 // pred_region
      %s2110 = ssub.s32 128, 128
      %2111 = vsyncadd [#allocation4], %s2110
      %s2112 = sshll.u32 [#allocation10], 4
      %s2113 = int_to_ptr.vmem [resolvable:$true] %s2112
      %2118 = dma.vmem_to_hbm [thread:$0]  %s2113, 128, %s6, [#allocation4], 64, 64, 4
    $region45: #{_forward_padded.1} parent=1 // pred_fallthru
      _
    // Predicated region
    $region46: #{_forward_padded.1} parent=1 // pred_check
      _
    $region47: #{_forward_padded.1} parent=1 // pred_check_branch
      %2120 = sbr.rel (0) target = $region49
    $region48: #{_forward_padded.1} parent=1 // pred_region
      %2121 = dma.done [#allocation4], 128
    $region49: #{_forward_padded.1} parent=1 // pred_fallthru
      _
    %2122 = vsyncpa [#allocation3], 1
    %2123 = vsyncpa [#allocation6], 1
    %2124 = vsyncpa [#allocation9], 1
    %2125 = vsyncpa [#allocation4], 1

</llo_original>
